<compile_context>
chip_gen: v5e
topology: v5e:2x2
jax: 0.10.0
libtpu: 0.0.40
codegen_flags: <defaults>
</compile_context>

<pallas_src>
import functools
import math

import jax
import jax.numpy as jnp
from jax.experimental import pallas as pl
from jax.experimental.pallas import tpu as pltpu


NEG_BIG = -1e30  # finite additive mask value (avoids -inf arithmetic / NaN)


# ---------------------------------------------------------------------------
# Kernel
# ---------------------------------------------------------------------------
def _layernorm(x32, w, b, d_true, eps=1e-5):
    """f32 LayerNorm over a zero-padded feature axis (padded lanes must be 0)."""
    inv_d = 1.0 / d_true
    mu = jnp.sum(x32, axis=-1, keepdims=True) * inv_d
    ms = jnp.sum(x32 * x32, axis=-1, keepdims=True) * inv_d
    var = ms - mu * mu
    return (x32 - mu) * jax.lax.rsqrt(var + eps) * w + b


def transformer_kernel(x_ref, bias_ref,
                       ln1w_ref, ln1b_ref, wqkv_ref, bqkv_ref, wo_ref, bo_ref,
                       ln2w_ref, ln2b_ref, wfc_ref, bfc_ref, wpr_ref, bpr_ref,
                       o_ref, *, d_true, n_head):
    """One ResidualAttentionBlock per grid step; activation resident in o_ref."""
    layer = pl.program_id(0)

    @pl.when(layer == 0)
    def _():
        o_ref[...] = x_ref[...]

    x = o_ref[...]                                   # (N, Dp) f32, N = B*S (padded)
    n_tok, d_pad = x.shape
    dh_pad = d_pad // n_head

    # ---------------- attention branch:  x + MHA(LN1(x)) -------------------
    xn = _layernorm(x, ln1w_ref[...], ln1b_ref[...], d_true)
    qkv = jnp.dot(xn.astype(jnp.bfloat16), wqkv_ref[...],
                  preferred_element_type=jnp.float32) + bqkv_ref[...]   # (N, 3*Dp)
    q = qkv[:, 0 * d_pad:1 * d_pad].astype(jnp.bfloat16)  # 1/sqrt(dh) folded in W_q
    k = qkv[:, 1 * d_pad:2 * d_pad].astype(jnp.bfloat16)
    v = qkv[:, 2 * d_pad:3 * d_pad].astype(jnp.bfloat16)

    # heads batched on a leading axis -> (H, N, Dhp); static lane slices only
    qh = jnp.stack([q[:, h * dh_pad:(h + 1) * dh_pad] for h in range(n_head)], axis=0)
    kh = jnp.stack([k[:, h * dh_pad:(h + 1) * dh_pad] for h in range(n_head)], axis=0)
    vh = jnp.stack([v[:, h * dh_pad:(h + 1) * dh_pad] for h in range(n_head)], axis=0)

    sc = jnp.einsum('hqd,hkd->hqk', qh, kh,
                    preferred_element_type=jnp.float32)                 # (H, N, N)
    sc = sc + bias_ref[...][None, :, :]     # additive key-padding + batch-block mask
    m = jnp.max(sc, axis=-1, keepdims=True)
    e = jnp.exp(sc - m)
    p = e * pl.reciprocal(jnp.sum(e, axis=-1, keepdims=True), approx=True)
    ah = jnp.einsum('hqk,hkd->hqd', p.astype(jnp.bfloat16), vh,
                    preferred_element_type=jnp.float32)                 # (H, N, Dhp)

    # head-batched output projection (no lane concatenate), reduce over heads
    proj = jnp.einsum('hnd,hdo->hno', ah.astype(jnp.bfloat16), wo_ref[...],
                      preferred_element_type=jnp.float32)               # (H, N, Dp)
    x1 = x + jnp.sum(proj, axis=0) + bo_ref[...]

    # ---------------- MLP branch:  x + MLP(LN2(x)) --------------------------
    xn2 = _layernorm(x1, ln2w_ref[...], ln2b_ref[...], d_true)
    hid = jnp.dot(xn2.astype(jnp.bfloat16), wfc_ref[...],
                  preferred_element_type=jnp.float32) + bfc_ref[...]    # (N, 4D)
    hid = hid * jax.nn.sigmoid(1.702 * hid)                             # QuickGELU
    mlp = jnp.dot(hid.astype(jnp.bfloat16), wpr_ref[...],
                  preferred_element_type=jnp.float32) + bpr_ref[...]    # (N, Dp)

    o_ref[...] = (x1 + mlp).astype(o_ref.dtype)


# ---------------------------------------------------------------------------
# Parameter preparation: pad / transpose / fold / stack / bf16
# ---------------------------------------------------------------------------
def _round_up(v, m):
    return ((v + m - 1) // m) * m


def prepare_params(per_layer_params, n_head, d_model):
    d_pad = max(128, _round_up(d_model, 128))
    assert d_pad % n_head == 0, "padded width must stay divisible by n_head"
    dh = d_model // n_head
    dh_pad = d_pad // n_head
    h4 = 4 * d_model
    h4_pad = max(128, _round_up(h4, 128))
    scale = 1.0 / math.sqrt(dh)

    def head_pad_cols(a):          # (..., H*dh) -> (..., H*dh_pad), per-head zero pad
        a = a.reshape(a.shape[:-1] + (n_head, dh))
        a = jnp.pad(a, [(0, 0)] * (a.ndim - 2) + [(0, 0), (0, dh_pad - dh)])
        return a.reshape(a.shape[:-2] + (n_head * dh_pad,))

    def pad_cols(a, tgt):
        return jnp.pad(a, [(0, 0)] * (a.ndim - 1) + [(0, tgt - a.shape[-1])])

    def pad_rows(a, tgt):
        return jnp.pad(a, [(0, tgt - a.shape[0])] + [(0, 0)] * (a.ndim - 1))

    per_layer = []
    for p in per_layer_params:
        d = d_model
        # QKV: stored as x @ W with shape (Dp, 3*Dp), per-head padded outputs;
        # 1/sqrt(dh) folded into the Q columns + bias.
        w_in, b_in = p['w_in'], p['b_in']
        blocks_w, blocks_b = [], []
        for i, fold in ((0, scale), (1, 1.0), (2, 1.0)):       # q, k, v
            w_t = w_in[i * d:(i + 1) * d].T * fold             # (d_in, d_out)
            b_t = b_in[i * d:(i + 1) * d] * fold
            blocks_w.append(pad_rows(head_pad_cols(w_t), d_pad))
            blocks_b.append(head_pad_cols(b_t))
        w_qkv = jnp.concatenate(blocks_w, axis=1)              # (Dp, 3*Dp)
        b_qkv = jnp.concatenate(blocks_b)[None, :]             # (1, 3*Dp)

        # out_proj: stored per head as (H, Dhp, Dp)
        wo_t = p['w_out'].T.reshape(n_head, dh, d)             # rows = head features
        wo_t = jnp.pad(wo_t, ((0, 0), (0, dh_pad - dh), (0, d_pad - d)))
        b_o = pad_cols(p['b_out'][None, :], d_pad)

        ln1_w = pad_cols(p['ln1_w'][None, :], d_pad)
        ln1_b = pad_cols(p['ln1_b'][None, :], d_pad)
        ln2_w = pad_cols(p['ln2_w'][None, :], d_pad)
        ln2_b = pad_cols(p['ln2_b'][None, :], d_pad)

        # MLP: stored as x @ W
        w_fc = pad_rows(pad_cols(p['w_fc'].T, h4_pad), d_pad)  # (Dp, H4p)
        b_fc = pad_cols(p['b_fc'][None, :], h4_pad)
        w_pr = pad_rows(pad_cols(p['w_pr'].T, d_pad), h4_pad)  # (H4p, Dp)
        b_pr = pad_cols(p['b_pr'][None, :], d_pad)

        per_layer.append((ln1_w, ln1_b,
                          w_qkv.astype(jnp.bfloat16), b_qkv,
                          wo_t.astype(jnp.bfloat16), b_o,
                          ln2_w, ln2_b,
                          w_fc.astype(jnp.bfloat16), b_fc,
                          w_pr.astype(jnp.bfloat16), b_pr))

    stacked = [jnp.stack(parts, axis=0) for parts in zip(*per_layer)]
    return d_pad, stacked


# ---------------------------------------------------------------------------
# pallas_call wrapper
# ---------------------------------------------------------------------------
def _param_spec(arr):
    shp = arr.shape[1:]                      # drop the stacked layer axis (squeezed)
    zeros = (0,) * len(shp)
    return pl.BlockSpec((None,) + shp, lambda l, _z=zeros: (l,) + _z)


def transformer_pallas(x_flat, attn_bias, stacked, n_head, d_model):
    n_tok, d_pad = x_flat.shape
    num_layers = stacked[0].shape[0]

    def const2d(shape):
        return pl.BlockSpec(shape, lambda l: (0, 0))

    in_specs = [const2d((n_tok, d_pad)),      # x (loaded once, resident)
                const2d((n_tok, n_tok))]      # additive attention bias
    in_specs += [_param_spec(a) for a in stacked]

    kernel = functools.partial(transformer_kernel, d_true=d_model, n_head=n_head)
    # NOTE: at production widths set vmem_limit_bytes / Buffered(1) budgets for
    # the per-layer weight blocks; here the bf16 weights are tiny so defaults
    # are fine.
    return pl.pallas_call(
        kernel,
        out_shape=jax.ShapeDtypeStruct((n_tok, d_pad), jnp.float32),
        grid=(num_layers,),
        in_specs=in_specs,
        out_specs=pl.BlockSpec((n_tok, d_pad), lambda l: (0, 0)),
        compiler_params=pltpu.CompilerParams(
            # the layer axis carries the VMEM-resident activation -> serial
            dimension_semantics=("arbitrary",),
        ),
    )(x_flat, attn_bias, *stacked)


def transformer_forward(x_sbd, x_mask_bs, per_layer_params, n_head):
    """x_sbd: (seq, batch, width); x_mask_bs: (batch, seq) bool (True = pad key)."""
    s, b, d = x_sbd.shape
    n_tok = b * s
    n_tok_pad = max(8, _round_up(n_tok, 8))   # sublane-aligned token rows
    d_pad, stacked = prepare_params(per_layer_params, n_head, d)

    # (S, B, D) -> flattened, zero-padded (Np, Dp) token matrix
    x = jnp.transpose(x_sbd, (1, 0, 2)).reshape(n_tok, d).astype(jnp.float32)
    x = jnp.pad(x, ((0, n_tok_pad - n_tok), (0, d_pad - d)))

    # additive mask: disallow cross-batch attention, masked (padded) keys and
    # padding-row keys.
    batch_id = jnp.concatenate([jnp.repeat(jnp.arange(b), s),
                                jnp.full((n_tok_pad - n_tok,), -1, jnp.int32)])
    same_batch = batch_id[:, None] == batch_id[None, :]
    if x_mask_bs is None:
        key_valid = jnp.ones((n_tok,), jnp.bool_)
    else:
        key_valid = jnp.logical_not(x_mask_bs.reshape(n_tok))
    key_valid = jnp.concatenate(
        [key_valid, jnp.zeros((n_tok_pad - n_tok,), jnp.bool_)])
    bias = jnp.where(same_batch & key_valid[None, :], 0.0, NEG_BIG).astype(jnp.float32)

    out = transformer_pallas(x, bias, stacked, n_head, d)
    out = out[:n_tok, :d].reshape(b, s, d)
    return jnp.transpose(out, (1, 0, 2))


# ---------------------------------------------------------------------------
# Deterministic init (natural PyTorch parameter shapes)
# ---------------------------------------------------------------------------
def init_block_params(key, d):
    ks = jax.random.split(key, 12)
    sd = 0.05
    return dict(
        ln1_w=1.0 + sd * jax.random.normal(ks[0], (d,), jnp.float32),
        ln1_b=sd * jax.random.normal(ks[1], (d,), jnp.float32),
        w_in=sd * jax.random.normal(ks[2], (3 * d, d), jnp.float32),   # in_proj_weight
        b_in=sd * jax.random.normal(ks[3], (3 * d,), jnp.float32),     # in_proj_bias
        w_out=sd * jax.random.normal(ks[4], (d, d), jnp.float32),      # out_proj.weight
        b_out=sd * jax.random.normal(ks[5], (d,), jnp.float32),
        ln2_w=1.0 + sd * jax.random.normal(ks[6], (d,), jnp.float32),
        ln2_b=sd * jax.random.normal(ks[7], (d,), jnp.float32),
        w_fc=sd * jax.random.normal(ks[8], (4 * d, d), jnp.float32),   # mlp.c_fc
        b_fc=sd * jax.random.normal(ks[9], (4 * d,), jnp.float32),
        w_pr=sd * jax.random.normal(ks[10], (d, 4 * d), jnp.float32),  # mlp.c_proj
        b_pr=sd * jax.random.normal(ks[11], (d,), jnp.float32),
    )


# ---------------------------------------------------------------------------
# Pure-JAX f32 reference (PyTorch semantics) for the correctness check
# ---------------------------------------------------------------------------
def ref_block(x, key_pad_mask, p, n_head):
    b, s, d = x.shape
    dh = d // n_head

    def ln(z, w, b_):
        mu = z.mean(-1, keepdims=True)
        var = ((z - mu) ** 2).mean(-1, keepdims=True)
        return (z - mu) / jnp.sqrt(var + 1e-5) * w + b_

    xn = ln(x, p['ln1_w'], p['ln1_b'])
    qkv = xn @ p['w_in'].T + p['b_in']
    q, k, v = qkv[..., :d], qkv[..., d:2 * d], qkv[..., 2 * d:]
    q = q.reshape(b, s, n_head, dh).transpose(0, 2, 1, 3) / math.sqrt(dh)
    k = k.reshape(b, s, n_head, dh).transpose(0, 2, 1, 3)
    v = v.reshape(b, s, n_head, dh).transpose(0, 2, 1, 3)
    sc = jnp.einsum('bhqd,bhkd->bhqk', q, k)
    if key_pad_mask is not None:
        sc = jnp.where(key_pad_mask[:, None, None, :], -jnp.inf, sc)
    pr = jax.nn.softmax(sc, axis=-1)
    a = jnp.einsum('bhqk,bhkd->bhqd', pr, v).transpose(0, 2, 1, 3).reshape(b, s, d)
    x = x + a @ p['w_out'].T + p['b_out']
    xn2 = ln(x, p['ln2_w'], p['ln2_b'])
    h = xn2 @ p['w_fc'].T + p['b_fc']
    h = h * jax.nn.sigmoid(1.702 * h)
    return x + h @ p['w_pr'].T + p['b_pr']


# ---------------------------------------------------------------------------
if __name__ == "__main__":
    SEQ, BATCH, WIDTH, HEADS, LAYERS = 8, 2, 32, 4, 3
    n_blocks = LAYERS - 1   # matches the PyTorch module (builds layers - 1 blocks)

    key = jax.random.PRNGKey(0)
    kx, *kps = jax.random.split(key, 1 + n_blocks)
    x = jax.random.normal(kx, (SEQ, BATCH, WIDTH), jnp.float32)
    x_mask = jnp.zeros((BATCH, SEQ), jnp.bool_).at[1, -2:].set(True)
    params = [init_block_params(kp, WIDTH) for kp in kps]

    fwd = jax.jit(functools.partial(transformer_forward, n_head=HEADS))
    out = fwd(x, x_mask, params)
    out = jax.block_until_ready(out)
    assert out.shape == (SEQ, BATCH, WIDTH)

    # reference check (f32 reference; kernel uses bf16 MXU operands)
    xr = jnp.transpose(x, (1, 0, 2))
    for p in params:
        xr = ref_block(xr, x_mask, p, HEADS)
    xr = jnp.transpose(xr, (1, 0, 2))
    max_err = float(jnp.max(jnp.abs(out - xr)))
    assert max_err < 1e-2, f"mismatch vs reference: {max_err}"

    print("KERNEL_OK")
</pallas_src>

<mosaic_0001>
module attributes {stable_mosaic.version = 11 : i64} {
  func.func @transformer_kernel(%arg0: i32, %arg1: memref<16x128xf32, #tpu.memory_space<vmem>>, %arg2: memref<16x16xf32, #tpu.memory_space<vmem>>, %arg3: memref<1x1x128xf32, #tpu.memory_space<vmem>>, %arg4: memref<1x1x128xf32, #tpu.memory_space<vmem>>, %arg5: memref<1x128x384xbf16, #tpu.memory_space<vmem>>, %arg6: memref<1x1x384xf32, #tpu.memory_space<vmem>>, %arg7: memref<1x4x32x128xbf16, #tpu.memory_space<vmem>>, %arg8: memref<1x1x128xf32, #tpu.memory_space<vmem>>, %arg9: memref<1x1x128xf32, #tpu.memory_space<vmem>>, %arg10: memref<1x1x128xf32, #tpu.memory_space<vmem>>, %arg11: memref<1x128x128xbf16, #tpu.memory_space<vmem>>, %arg12: memref<1x1x128xf32, #tpu.memory_space<vmem>>, %arg13: memref<1x128x128xbf16, #tpu.memory_space<vmem>>, %arg14: memref<1x1x128xf32, #tpu.memory_space<vmem>>, %arg15: memref<16x128xf32, #tpu.memory_space<vmem>>) attributes {dimension_semantics = [#tpu.dimension_semantics<arbitrary>], iteration_bounds = array<i64: 2>, scalar_prefetch = 0 : i64, scratch_operands = 0 : i64, tpu.core_type = #tpu.core_type<tc>, window_params = [{pipeline_mode = #tpu.pipeline_mode<synchronous>, transform_indices = @transform_0, window_bounds = array<i64: 16, 128>}, {pipeline_mode = #tpu.pipeline_mode<synchronous>, transform_indices = @transform_1, window_bounds = array<i64: 16, 16>}, {transform_indices = @transform_2, window_bounds = array<i64: 1, 1, 128>}, {transform_indices = @transform_3, window_bounds = array<i64: 1, 1, 128>}, {transform_indices = @transform_4, window_bounds = array<i64: 1, 128, 384>}, {transform_indices = @transform_5, window_bounds = array<i64: 1, 1, 384>}, {transform_indices = @transform_6, window_bounds = array<i64: 1, 4, 32, 128>}, {transform_indices = @transform_7, window_bounds = array<i64: 1, 1, 128>}, {transform_indices = @transform_8, window_bounds = array<i64: 1, 1, 128>}, {transform_indices = @transform_9, window_bounds = array<i64: 1, 1, 128>}, {transform_indices = @transform_10, window_bounds = array<i64: 1, 128, 128>}, {transform_indices = @transform_11, window_bounds = array<i64: 1, 1, 128>}, {transform_indices = @transform_12, window_bounds = array<i64: 1, 128, 128>}, {transform_indices = @transform_13, window_bounds = array<i64: 1, 1, 128>}, {pipeline_mode = #tpu.pipeline_mode<synchronous>, transform_indices = @transform_14, window_bounds = array<i64: 16, 128>}]} {
    %c0_i32 = arith.constant 0 : i32
    %0 = arith.cmpi eq, %arg0, %c0_i32 : i32
    %1 = arith.extui %0 : i1 to i32
    %c0_i32_0 = arith.constant 0 : i32
    %2 = arith.cmpi ne, %1, %c0_i32_0 : i32
    scf.if %2 {
      %c0_63 = arith.constant 0 : index
      %c0_64 = arith.constant 0 : index
      %150 = vector.load %arg1[%c0_63, %c0_64] : memref<16x128xf32, #tpu.memory_space<vmem>>, vector<16x128xf32>
      %c0_65 = arith.constant 0 : index
      %c0_66 = arith.constant 0 : index
      %151 = vector.load %arg15[%c0_65, %c0_66] : memref<16x128xf32, #tpu.memory_space<vmem>>, vector<16x128xf32>
      tpu.vector_store %arg15[%c0_65, %c0_66], %150 {strides = array<i32>} : memref<16x128xf32, #tpu.memory_space<vmem>>, vector<16x128xf32>,
    } else {
    }
    %c0 = arith.constant 0 : index
    %c0_1 = arith.constant 0 : index
    %3 = vector.load %arg15[%c0, %c0_1] : memref<16x128xf32, #tpu.memory_space<vmem>>, vector<16x128xf32>
    %c0_2 = arith.constant 0 : index
    %c0_3 = arith.constant 0 : index
    %c0_4 = arith.constant 0 : index
    %4 = vector.load %arg3[%c0_2, %c0_3, %c0_4] : memref<1x1x128xf32, #tpu.memory_space<vmem>>, vector<1x1x128xf32>
    %5 = vector.shape_cast %4 : vector<1x1x128xf32> to vector<1x128xf32>
    %c0_5 = arith.constant 0 : index
    %c0_6 = arith.constant 0 : index
    %c0_7 = arith.constant 0 : index
    %6 = vector.load %arg4[%c0_5, %c0_6, %c0_7] : memref<1x1x128xf32, #tpu.memory_space<vmem>>, vector<1x1x128xf32>
    %7 = vector.shape_cast %6 : vector<1x1x128xf32> to vector<1x128xf32>
    %cst = arith.constant dense<0.000000e+00> : vector<16xf32>
    %8 = vector.multi_reduction <add>, %3, %cst [1] : vector<16x128xf32> to vector<16xf32>
    %9 = vector.shape_cast %8 : vector<16xf32> to vector<16x1xf32>
    %cst_8 = arith.constant 3.125000e-02 : f32
    %10 = vector.broadcast %cst_8 : f32 to vector<16x1xf32>
    %11 = arith.mulf %9, %10 : vector<16x1xf32>
    %12 = arith.mulf %3, %3 : vector<16x128xf32>
    %cst_9 = arith.constant dense<0.000000e+00> : vector<16xf32>
    %13 = vector.multi_reduction <add>, %12, %cst_9 [1] : vector<16x128xf32> to vector<16xf32>
    %14 = vector.shape_cast %13 : vector<16xf32> to vector<16x1xf32>
    %cst_10 = arith.constant 3.125000e-02 : f32
    %15 = vector.broadcast %cst_10 : f32 to vector<16x1xf32>
    %16 = arith.mulf %14, %15 : vector<16x1xf32>
    %17 = arith.mulf %11, %11 : vector<16x1xf32>
    %18 = arith.subf %16, %17 : vector<16x1xf32>
    %19 = vector.broadcast %11 : vector<16x1xf32> to vector<16x128xf32>
    %20 = arith.subf %3, %19 : vector<16x128xf32>
    %cst_11 = arith.constant 9.99999974E-6 : f32
    %21 = vector.broadcast %cst_11 : f32 to vector<16x1xf32>
    %22 = arith.addf %18, %21 : vector<16x1xf32>
    %23 = math.rsqrt %22 : vector<16x1xf32>
    %24 = vector.broadcast %23 : vector<16x1xf32> to vector<16x128xf32>
    %25 = arith.mulf %20, %24 : vector<16x128xf32>
    %26 = vector.broadcast %5 : vector<1x128xf32> to vector<16x128xf32>
    %27 = arith.mulf %25, %26 : vector<16x128xf32>
    %28 = vector.broadcast %7 : vector<1x128xf32> to vector<16x128xf32>
    %29 = arith.addf %27, %28 : vector<16x128xf32>
    %30 = arith.truncf %29 : vector<16x128xf32> to vector<16x128xbf16>
    %c0_12 = arith.constant 0 : index
    %c0_13 = arith.constant 0 : index
    %c0_14 = arith.constant 0 : index
    %31 = vector.load %arg5[%c0_12, %c0_13, %c0_14] : memref<1x128x384xbf16, #tpu.memory_space<vmem>>, vector<1x128x384xbf16>
    %32 = vector.shape_cast %31 : vector<1x128x384xbf16> to vector<128x384xbf16>
    %cst_15 = arith.constant dense<0.000000e+00> : vector<16x384xf32>
    %33 = tpu.matmul %30, %32, %cst_15 {dimension_numbers = #tpu.dot_dimension_numbers<[1], [0], [0], [1], [0, 0, 1, 1], [], []>} : vector<16x128xbf16>, vector<128x384xbf16>, vector<16x384xf32> -> vector<16x384xf32>
    %c0_16 = arith.constant 0 : index
    %c0_17 = arith.constant 0 : index
    %c0_18 = arith.constant 0 : index
    %34 = vector.load %arg6[%c0_16, %c0_17, %c0_18] : memref<1x1x384xf32, #tpu.memory_space<vmem>>, vector<1x1x384xf32>
    %35 = vector.shape_cast %34 : vector<1x1x384xf32> to vector<1x384xf32>
    %36 = vector.broadcast %35 : vector<1x384xf32> to vector<16x384xf32>
    %37 = arith.addf %33, %36 : vector<16x384xf32>
    %38 = vector.extract_strided_slice %37 {offsets = [0, 0], sizes = [16, 128], strides = [1, 1]} : vector<16x384xf32> to vector<16x128xf32>
    %39 = arith.truncf %38 : vector<16x128xf32> to vector<16x128xbf16>
    %40 = vector.extract_strided_slice %37 {offsets = [0, 128], sizes = [16, 128], strides = [1, 1]} : vector<16x384xf32> to vector<16x128xf32>
    %41 = arith.truncf %40 : vector<16x128xf32> to vector<16x128xbf16>
    %42 = vector.extract_strided_slice %37 {offsets = [0, 256], sizes = [16, 128], strides = [1, 1]} : vector<16x384xf32> to vector<16x128xf32>
    %43 = arith.truncf %42 : vector<16x128xf32> to vector<16x128xbf16>
    %44 = vector.extract_strided_slice %39 {offsets = [0, 0], sizes = [16, 32], strides = [1, 1]} : vector<16x128xbf16> to vector<16x32xbf16>
    %45 = vector.extract_strided_slice %39 {offsets = [0, 32], sizes = [16, 32], strides = [1, 1]} : vector<16x128xbf16> to vector<16x32xbf16>
    %46 = vector.extract_strided_slice %39 {offsets = [0, 64], sizes = [16, 32], strides = [1, 1]} : vector<16x128xbf16> to vector<16x32xbf16>
    %47 = vector.extract_strided_slice %39 {offsets = [0, 96], sizes = [16, 32], strides = [1, 1]} : vector<16x128xbf16> to vector<16x32xbf16>
    %48 = vector.shape_cast %44 : vector<16x32xbf16> to vector<1x16x32xbf16>
    %49 = vector.shape_cast %45 : vector<16x32xbf16> to vector<1x16x32xbf16>
    %50 = vector.shape_cast %46 : vector<16x32xbf16> to vector<1x16x32xbf16>
    %51 = vector.shape_cast %47 : vector<16x32xbf16> to vector<1x16x32xbf16>
    %52 = tpu.concatenate %48, %49, %50, %51 in 0 : vector<1x16x32xbf16>, vector<1x16x32xbf16>, vector<1x16x32xbf16>, vector<1x16x32xbf16> -> vector<4x16x32xbf16>
    %53 = vector.extract_strided_slice %41 {offsets = [0, 0], sizes = [16, 32], strides = [1, 1]} : vector<16x128xbf16> to vector<16x32xbf16>
    %54 = vector.extract_strided_slice %41 {offsets = [0, 32], sizes = [16, 32], strides = [1, 1]} : vector<16x128xbf16> to vector<16x32xbf16>
    %55 = vector.extract_strided_slice %41 {offsets = [0, 64], sizes = [16, 32], strides = [1, 1]} : vector<16x128xbf16> to vector<16x32xbf16>
    %56 = vector.extract_strided_slice %41 {offsets = [0, 96], sizes = [16, 32], strides = [1, 1]} : vector<16x128xbf16> to vector<16x32xbf16>
    %57 = vector.shape_cast %53 : vector<16x32xbf16> to vector<1x16x32xbf16>
    %58 = vector.shape_cast %54 : vector<16x32xbf16> to vector<1x16x32xbf16>
    %59 = vector.shape_cast %55 : vector<16x32xbf16> to vector<1x16x32xbf16>
    %60 = vector.shape_cast %56 : vector<16x32xbf16> to vector<1x16x32xbf16>
    %61 = tpu.concatenate %57, %58, %59, %60 in 0 : vector<1x16x32xbf16>, vector<1x16x32xbf16>, vector<1x16x32xbf16>, vector<1x16x32xbf16> -> vector<4x16x32xbf16>
    %62 = vector.extract_strided_slice %43 {offsets = [0, 0], sizes = [16, 32], strides = [1, 1]} : vector<16x128xbf16> to vector<16x32xbf16>
    %63 = vector.extract_strided_slice %43 {offsets = [0, 32], sizes = [16, 32], strides = [1, 1]} : vector<16x128xbf16> to vector<16x32xbf16>
    %64 = vector.extract_strided_slice %43 {offsets = [0, 64], sizes = [16, 32], strides = [1, 1]} : vector<16x128xbf16> to vector<16x32xbf16>
    %65 = vector.extract_strided_slice %43 {offsets = [0, 96], sizes = [16, 32], strides = [1, 1]} : vector<16x128xbf16> to vector<16x32xbf16>
    %66 = vector.shape_cast %62 : vector<16x32xbf16> to vector<1x16x32xbf16>
    %67 = vector.shape_cast %63 : vector<16x32xbf16> to vector<1x16x32xbf16>
    %68 = vector.shape_cast %64 : vector<16x32xbf16> to vector<1x16x32xbf16>
    %69 = vector.shape_cast %65 : vector<16x32xbf16> to vector<1x16x32xbf16>
    %70 = tpu.concatenate %66, %67, %68, %69 in 0 : vector<1x16x32xbf16>, vector<1x16x32xbf16>, vector<1x16x32xbf16>, vector<1x16x32xbf16> -> vector<4x16x32xbf16>
    "tpu.trace_start"() <{level = 10 : i32, message = "hqd,hkd->hqk"}> : () -> ()
    %cst_19 = arith.constant dense<0.000000e+00> : vector<4x16x16xf32>
    %71 = tpu.matmul %52, %61, %cst_19 {dimension_numbers = #tpu.dot_dimension_numbers<[2], [2], [1], [1], [0, 0, 0, 1, 1, 1], [0], [0]>} : vector<4x16x32xbf16>, vector<4x16x32xbf16>, vector<4x16x16xf32> -> vector<4x16x16xf32>
    "tpu.trace_stop"() : () -> ()
    %c0_20 = arith.constant 0 : index
    %c0_21 = arith.constant 0 : index
    %72 = vector.load %arg2[%c0_20, %c0_21] : memref<16x16xf32, #tpu.memory_space<vmem>>, vector<16x16xf32>
    %73 = vector.shape_cast %72 : vector<16x16xf32> to vector<1x16x16xf32>
    %74 = vector.broadcast %73 : vector<1x16x16xf32> to vector<4x16x16xf32>
    %75 = arith.addf %71, %74 : vector<4x16x16xf32>
    %cst_22 = arith.constant dense<0xFF800000> : vector<4x16xf32>
    %76 = vector.multi_reduction <maximumf>, %75, %cst_22 [2] : vector<4x16x16xf32> to vector<4x16xf32>
    %77 = vector.shape_cast %76 : vector<4x16xf32> to vector<4x16x1xf32>
    %78 = vector.broadcast %77 : vector<4x16x1xf32> to vector<4x16x16xf32>
    %79 = arith.subf %75, %78 : vector<4x16x16xf32>
    %80 = math.exp %79 : vector<4x16x16xf32>
    %cst_23 = arith.constant dense<0.000000e+00> : vector<4x16xf32>
    %81 = vector.multi_reduction <add>, %80, %cst_23 [2] : vector<4x16x16xf32> to vector<4x16xf32>
    %82 = vector.shape_cast %81 : vector<4x16xf32> to vector<4x16x1xf32>
    %83 = tpu.reciprocal %82 {approx = true} : vector<4x16x1xf32> -> vector<4x16x1xf32>
    %84 = vector.broadcast %83 : vector<4x16x1xf32> to vector<4x16x16xf32>
    %85 = arith.mulf %80, %84 : vector<4x16x16xf32>
    %86 = arith.truncf %85 : vector<4x16x16xf32> to vector<4x16x16xbf16>
    "tpu.trace_start"() <{level = 10 : i32, message = "hqk,hkd->hqd"}> : () -> ()
    %cst_24 = arith.constant dense<0.000000e+00> : vector<4x16x32xf32>
    %87 = tpu.matmul %86, %70, %cst_24 {dimension_numbers = #tpu.dot_dimension_numbers<[2], [1], [1], [2], [0, 0, 0, 1, 1, 2], [0], [0]>} : vector<4x16x16xbf16>, vector<4x16x32xbf16>, vector<4x16x32xf32> -> vector<4x16x32xf32>
    "tpu.trace_stop"() : () -> ()
    %88 = arith.truncf %87 : vector<4x16x32xf32> to vector<4x16x32xbf16>
    %c0_25 = arith.constant 0 : index
    %c0_26 = arith.constant 0 : index
    %c0_27 = arith.constant 0 : index
    %c0_28 = arith.constant 0 : index
    %89 = vector.load %arg7[%c0_25, %c0_26, %c0_27, %c0_28] : memref<1x4x32x128xbf16, #tpu.memory_space<vmem>>, vector<1x4x32x128xbf16>
    %90 = vector.shape_cast %89 : vector<1x4x32x128xbf16> to vector<4x32x128xbf16>
    "tpu.trace_start"() <{level = 10 : i32, message = "hnd,hdo->hno"}> : () -> ()
    %cst_29 = arith.constant dense<0.000000e+00> : vector<4x16x128xf32>
    %91 = tpu.matmul %88, %90, %cst_29 {dimension_numbers = #tpu.dot_dimension_numbers<[2], [1], [1], [2], [0, 0, 0, 1, 1, 2], [0], [0]>} : vector<4x16x32xbf16>, vector<4x32x128xbf16>, vector<4x16x128xf32> -> vector<4x16x128xf32>
    "tpu.trace_stop"() : () -> ()
    %cst_30 = arith.constant dense<0.000000e+00> : vector<16x128xf32>
    %92 = vector.multi_reduction <add>, %91, %cst_30 [0] : vector<4x16x128xf32> to vector<16x128xf32>
    %93 = arith.addf %3, %92 : vector<16x128xf32>
    %c0_31 = arith.constant 0 : index
    %c0_32 = arith.constant 0 : index
    %c0_33 = arith.constant 0 : index
    %94 = vector.load %arg8[%c0_31, %c0_32, %c0_33] : memref<1x1x128xf32, #tpu.memory_space<vmem>>, vector<1x1x128xf32>
    %95 = vector.shape_cast %94 : vector<1x1x128xf32> to vector<1x128xf32>
    %96 = vector.broadcast %95 : vector<1x128xf32> to vector<16x128xf32>
    %97 = arith.addf %93, %96 : vector<16x128xf32>
    %c0_34 = arith.constant 0 : index
    %c0_35 = arith.constant 0 : index
    %c0_36 = arith.constant 0 : index
    %98 = vector.load %arg9[%c0_34, %c0_35, %c0_36] : memref<1x1x128xf32, #tpu.memory_space<vmem>>, vector<1x1x128xf32>
    %99 = vector.shape_cast %98 : vector<1x1x128xf32> to vector<1x128xf32>
    %c0_37 = arith.constant 0 : index
    %c0_38 = arith.constant 0 : index
    %c0_39 = arith.constant 0 : index
    %100 = vector.load %arg10[%c0_37, %c0_38, %c0_39] : memref<1x1x128xf32, #tpu.memory_space<vmem>>, vector<1x1x128xf32>
    %101 = vector.shape_cast %100 : vector<1x1x128xf32> to vector<1x128xf32>
    %cst_40 = arith.constant dense<0.000000e+00> : vector<16xf32>
    %102 = vector.multi_reduction <add>, %97, %cst_40 [1] : vector<16x128xf32> to vector<16xf32>
    %103 = vector.shape_cast %102 : vector<16xf32> to vector<16x1xf32>
    %cst_41 = arith.constant 3.125000e-02 : f32
    %104 = vector.broadcast %cst_41 : f32 to vector<16x1xf32>
    %105 = arith.mulf %103, %104 : vector<16x1xf32>
    %106 = arith.mulf %97, %97 : vector<16x128xf32>
    %cst_42 = arith.constant dense<0.000000e+00> : vector<16xf32>
    %107 = vector.multi_reduction <add>, %106, %cst_42 [1] : vector<16x128xf32> to vector<16xf32>
    %108 = vector.shape_cast %107 : vector<16xf32> to vector<16x1xf32>
    %cst_43 = arith.constant 3.125000e-02 : f32
    %109 = vector.broadcast %cst_43 : f32 to vector<16x1xf32>
    %110 = arith.mulf %108, %109 : vector<16x1xf32>
    %111 = arith.mulf %105, %105 : vector<16x1xf32>
    %112 = arith.subf %110, %111 : vector<16x1xf32>
    %113 = vector.broadcast %105 : vector<16x1xf32> to vector<16x128xf32>
    %114 = arith.subf %97, %113 : vector<16x128xf32>
    %cst_44 = arith.constant 9.99999974E-6 : f32
    %115 = vector.broadcast %cst_44 : f32 to vector<16x1xf32>
    %116 = arith.addf %112, %115 : vector<16x1xf32>
    %117 = math.rsqrt %116 : vector<16x1xf32>
    %118 = vector.broadcast %117 : vector<16x1xf32> to vector<16x128xf32>
    %119 = arith.mulf %114, %118 : vector<16x128xf32>
    %120 = vector.broadcast %99 : vector<1x128xf32> to vector<16x128xf32>
    %121 = arith.mulf %119, %120 : vector<16x128xf32>
    %122 = vector.broadcast %101 : vector<1x128xf32> to vector<16x128xf32>
    %123 = arith.addf %121, %122 : vector<16x128xf32>
    %124 = arith.truncf %123 : vector<16x128xf32> to vector<16x128xbf16>
    %c0_45 = arith.constant 0 : index
    %c0_46 = arith.constant 0 : index
    %c0_47 = arith.constant 0 : index
    %125 = vector.load %arg11[%c0_45, %c0_46, %c0_47] : memref<1x128x128xbf16, #tpu.memory_space<vmem>>, vector<1x128x128xbf16>
    %126 = vector.shape_cast %125 : vector<1x128x128xbf16> to vector<128x128xbf16>
    %cst_48 = arith.constant dense<0.000000e+00> : vector<16x128xf32>
    %127 = tpu.matmul %124, %126, %cst_48 {dimension_numbers = #tpu.dot_dimension_numbers<[1], [0], [0], [1], [0, 0, 1, 1], [], []>} : vector<16x128xbf16>, vector<128x128xbf16>, vector<16x128xf32> -> vector<16x128xf32>
    %c0_49 = arith.constant 0 : index
    %c0_50 = arith.constant 0 : index
    %c0_51 = arith.constant 0 : index
    %128 = vector.load %arg12[%c0_49, %c0_50, %c0_51] : memref<1x1x128xf32, #tpu.memory_space<vmem>>, vector<1x1x128xf32>
    %129 = vector.shape_cast %128 : vector<1x1x128xf32> to vector<1x128xf32>
    %130 = vector.broadcast %129 : vector<1x128xf32> to vector<16x128xf32>
    %131 = arith.addf %127, %130 : vector<16x128xf32>
    %cst_52 = arith.constant 1.702000e+00 : f32
    %132 = vector.broadcast %cst_52 : f32 to vector<16x128xf32>
    %133 = arith.mulf %132, %131 : vector<16x128xf32>
    %134 = arith.negf %133 : vector<16x128xf32>
    %135 = math.exp %134 : vector<16x128xf32>
    %cst_53 = arith.constant 1.000000e+00 : f32
    %136 = vector.broadcast %cst_53 : f32 to vector<16x128xf32>
    %137 = arith.addf %136, %135 : vector<16x128xf32>
    %138 = arith.divf %136, %137 : vector<16x128xf32>
    %139 = arith.mulf %131, %138 : vector<16x128xf32>
    %140 = arith.truncf %139 : vector<16x128xf32> to vector<16x128xbf16>
    %c0_54 = arith.constant 0 : index
    %c0_55 = arith.constant 0 : index
    %c0_56 = arith.constant 0 : index
    %141 = vector.load %arg13[%c0_54, %c0_55, %c0_56] : memref<1x128x128xbf16, #tpu.memory_space<vmem>>, vector<1x128x128xbf16>
    %142 = vector.shape_cast %141 : vector<1x128x128xbf16> to vector<128x128xbf16>
    %cst_57 = arith.constant dense<0.000000e+00> : vector<16x128xf32>
    %143 = tpu.matmul %140, %142, %cst_57 {dimension_numbers = #tpu.dot_dimension_numbers<[1], [0], [0], [1], [0, 0, 1, 1], [], []>} : vector<16x128xbf16>, vector<128x128xbf16>, vector<16x128xf32> -> vector<16x128xf32>
    %c0_58 = arith.constant 0 : index
    %c0_59 = arith.constant 0 : index
    %c0_60 = arith.constant 0 : index
    %144 = vector.load %arg14[%c0_58, %c0_59, %c0_60] : memref<1x1x128xf32, #tpu.memory_space<vmem>>, vector<1x1x128xf32>
    %145 = vector.shape_cast %144 : vector<1x1x128xf32> to vector<1x128xf32>
    %146 = vector.broadcast %145 : vector<1x128xf32> to vector<16x128xf32>
    %147 = arith.addf %143, %146 : vector<16x128xf32>
    %148 = arith.addf %97, %147 : vector<16x128xf32>
    %c0_61 = arith.constant 0 : index
    %c0_62 = arith.constant 0 : index
    %149 = vector.load %arg15[%c0_61, %c0_62] : memref<16x128xf32, #tpu.memory_space<vmem>>, vector<16x128xf32>
    tpu.vector_store %arg15[%c0_61, %c0_62], %148 {strides = array<i32>} : memref<16x128xf32, #tpu.memory_space<vmem>>, vector<16x128xf32>,
    return
  }
  func.func @transform_0(%arg0: i32) -> (i32, i32) {
    %c0_i32 = arith.constant 0 : i32
    %c0_i32_0 = arith.constant 0 : i32
    %c0_i32_1 = arith.constant 0 : i32
    return %c0_i32, %c0_i32_0 : i32, i32
  }
  func.func @transform_1(%arg0: i32) -> (i32, i32) {
    %c0_i32 = arith.constant 0 : i32
    %c0_i32_0 = arith.constant 0 : i32
    %c0_i32_1 = arith.constant 0 : i32
    return %c0_i32, %c0_i32_0 : i32, i32
  }
  func.func @transform_2(%arg0: i32) -> (i32, i32, i32) {
    %c0_i32 = arith.constant 0 : i32
    %c0_i32_0 = arith.constant 0 : i32
    %c0_i32_1 = arith.constant 0 : i32
    return %arg0, %c0_i32, %c0_i32_0 : i32, i32, i32
  }
  func.func @transform_3(%arg0: i32) -> (i32, i32, i32) {
    %c0_i32 = arith.constant 0 : i32
    %c0_i32_0 = arith.constant 0 : i32
    %c0_i32_1 = arith.constant 0 : i32
    return %arg0, %c0_i32, %c0_i32_0 : i32, i32, i32
  }
  func.func @transform_4(%arg0: i32) -> (i32, i32, i32) {
    %c0_i32 = arith.constant 0 : i32
    %c0_i32_0 = arith.constant 0 : i32
    %c0_i32_1 = arith.constant 0 : i32
    return %arg0, %c0_i32, %c0_i32_0 : i32, i32, i32
  }
  func.func @transform_5(%arg0: i32) -> (i32, i32, i32) {
    %c0_i32 = arith.constant 0 : i32
    %c0_i32_0 = arith.constant 0 : i32
    %c0_i32_1 = arith.constant 0 : i32
    return %arg0, %c0_i32, %c0_i32_0 : i32, i32, i32
  }
  func.func @transform_6(%arg0: i32) -> (i32, i32, i32, i32) {
    %c0_i32 = arith.constant 0 : i32
    %c0_i32_0 = arith.constant 0 : i32
    %c0_i32_1 = arith.constant 0 : i32
    %c0_i32_2 = arith.constant 0 : i32
    return %arg0, %c0_i32, %c0_i32_0, %c0_i32_1 : i32, i32, i32, i32
  }
  func.func @transform_7(%arg0: i32) -> (i32, i32, i32) {
    %c0_i32 = arith.constant 0 : i32
    %c0_i32_0 = arith.constant 0 : i32
    %c0_i32_1 = arith.constant 0 : i32
    return %arg0, %c0_i32, %c0_i32_0 : i32, i32, i32
  }
  func.func @transform_8(%arg0: i32) -> (i32, i32, i32) {
    %c0_i32 = arith.constant 0 : i32
    %c0_i32_0 = arith.constant 0 : i32
    %c0_i32_1 = arith.constant 0 : i32
    return %arg0, %c0_i32, %c0_i32_0 : i32, i32, i32
  }
  func.func @transform_9(%arg0: i32) -> (i32, i32, i32) {
    %c0_i32 = arith.constant 0 : i32
    %c0_i32_0 = arith.constant 0 : i32
    %c0_i32_1 = arith.constant 0 : i32
    return %arg0, %c0_i32, %c0_i32_0 : i32, i32, i32
  }
  func.func @transform_10(%arg0: i32) -> (i32, i32, i32) {
    %c0_i32 = arith.constant 0 : i32
    %c0_i32_0 = arith.constant 0 : i32
    %c0_i32_1 = arith.constant 0 : i32
    return %arg0, %c0_i32, %c0_i32_0 : i32, i32, i32
  }
  func.func @transform_11(%arg0: i32) -> (i32, i32, i32) {
    %c0_i32 = arith.constant 0 : i32
    %c0_i32_0 = arith.constant 0 : i32
    %c0_i32_1 = arith.constant 0 : i32
    return %arg0, %c0_i32, %c0_i32_0 : i32, i32, i32
  }
  func.func @transform_12(%arg0: i32) -> (i32, i32, i32) {
    %c0_i32 = arith.constant 0 : i32
    %c0_i32_0 = arith.constant 0 : i32
    %c0_i32_1 = arith.constant 0 : i32
    return %arg0, %c0_i32, %c0_i32_0 : i32, i32, i32
  }
  func.func @transform_13(%arg0: i32) -> (i32, i32, i32) {
    %c0_i32 = arith.constant 0 : i32
    %c0_i32_0 = arith.constant 0 : i32
    %c0_i32_1 = arith.constant 0 : i32
    return %arg0, %c0_i32, %c0_i32_0 : i32, i32, i32
  }
  func.func @transform_14(%arg0: i32) -> (i32, i32) {
    %c0_i32 = arith.constant 0 : i32
    %c0_i32_0 = arith.constant 0 : i32
    %c0_i32_1 = arith.constant 0 : i32
    return %c0_i32, %c0_i32_0 : i32, i32
  }
}

</mosaic_0001>

<llo_original>
// kernel: eq.8
$region0: #{eq.8}
  %s0 = inlined_call_operand.vmem [shape: s32[2,8], index: 0, kind: input, shape index: {}]
  %s1 = inlined_call_operand.vmem [shape: s32[16], index: 1, kind: output, shape index: {}]
  $region1: #{eq.8} parent=0
    #allocation0 [shape = 'u8[4096]{0}', space=vmem, size = 0x1000, scoped, tag = 'scoped mem for output reshape']
    #allocation1 [shape = 'u8[4096]{0}', space=vmem, size = 0x1000, scoped, tag = 'scoped mem for input reshape']
    %s3 = ssub.s32 4, 1
    %v4 = vld [vmem:[%s0] sm:%s3]
    %5 = vst [vmem:[#allocation1] sm:%s3] %v4
    %v6 = vld [vmem:[#allocation1] sm:$0x1]
    %vm7 = vcmask 64512
    %8 = vst.msk [vmem:[#allocation0] sm:$0x1] %vm7, %v6
    %s9 = scalar_lea.vmem [#allocation1], 1
    %v10 = vld [vmem:[%s9] sm:$0x1]
    %11 = vrot.lane.b32.xlu0 %v10, 8
    %v12 = vpop.permute.xlu0 %11
    %vm13 = vcmask 130112
    %14 = vst.msk [vmem:[#allocation0] sm:$0x1] %vm13, %v12
    %s16 = ssub.s32 2, 1
    %v17 = vld [vmem:[#allocation0] sm:%s16]
    %s19 = ssub.s32 2, 1
    %20 = vst [vmem:[%s1] sm:%s19] %v17

// kernel: transformer_forward.1
$region0: #{transformer_forward.1}
  #allocation0 [shape = 'u32[]', space=smem, size = 0x4, offset = 0x4, fixed_abs, tag = 'smem constant byte address 0x4 - core index']
  #allocation1 [shape = 'u32[72,128]{1,0:T(1,128)}', space=vmem, size = 0x9000, scoped, tag = 'internal scratch']
  %s0 = inlined_call_operand.vmem [shape: f32[16,128], index: 0, kind: input, shape index: {}]
  %s1 = inlined_call_operand.vmem [shape: f32[16,16], index: 1, kind: input, shape index: {}]
  %s2 = inlined_call_operand.vmem [shape: f32[2,1,128], index: 2, kind: input, shape index: {}]
  %s3 = inlined_call_operand.vmem [shape: f32[2,1,128], index: 3, kind: input, shape index: {}]
  %s4 = inlined_call_operand.vmem [shape: bf16[2,128,384], index: 4, kind: input, shape index: {}]
  %s5 = inlined_call_operand.vmem [shape: f32[2,1,384], index: 5, kind: input, shape index: {}]
  %s6 = inlined_call_operand.vmem [shape: bf16[2,4,32,128], index: 6, kind: input, shape index: {}]
  %s7 = inlined_call_operand.vmem [shape: f32[2,1,128], index: 7, kind: input, shape index: {}]
  %s8 = inlined_call_operand.vmem [shape: f32[2,1,128], index: 8, kind: input, shape index: {}]
  %s9 = inlined_call_operand.vmem [shape: f32[2,1,128], index: 9, kind: input, shape index: {}]
  %s10 = inlined_call_operand.vmem [shape: bf16[2,128,128], index: 10, kind: input, shape index: {}]
  %s11 = inlined_call_operand.vmem [shape: f32[2,1,128], index: 11, kind: input, shape index: {}]
  %s12 = inlined_call_operand.vmem [shape: bf16[2,128,128], index: 12, kind: input, shape index: {}]
  %s13 = inlined_call_operand.vmem [shape: f32[2,1,128], index: 13, kind: input, shape index: {}]
  %s14 = inlined_call_operand.vmem [shape: f32[16,128], index: 14, kind: output, shape index: {}]
  %s15 = sld [smem:[#allocation0]]
  $region93: #{transformer_forward.1} parent=0
    _
  %s17 = ssub.s32 1, %s15
  %s18 = scalar_select 0, %s17, %s15
  loop: start=0, step=1, limit=4
  $region2: #{transformer_forward.1} parent=0 // loop_pre_header
    _
  $region3: #{transformer_forward.1} parent=0 // loop_header
    %s20 = sphi 0, %s24
    %p21 = scmp.ge.s32.totalorder %s20, 4
    %s28 = sphi 0, %s28
    %s30 = sphi 0, %s28
    %s31 = sphi 0, %s30
    %s45 = sphi 0, %s31
    %s49 = sphi 0, %s49
    %s51 = sphi 0, %s49
    %s52 = sphi 0, %s51
    %s66 = sphi 0, %s52
    %s72 = sphi 0, %s74
    %s75 = sphi 0, %s72
    %s76 = sphi 0, %s75
    %s92 = sphi 0, %s76
    %s98 = sphi 0, %s100
    %s101 = sphi 0, %s98
    %s102 = sphi 0, %s101
    %s118 = sphi 0, %s102
    %s124 = sphi 0, %s126
    %s127 = sphi 0, %s124
    %s128 = sphi 0, %s127
    %s144 = sphi 0, %s128
    %s150 = sphi 0, %s152
    %s153 = sphi 0, %s150
    %s154 = sphi 0, %s153
    %s170 = sphi 0, %s154
    %s176 = sphi 0, %s178
    %s179 = sphi 0, %s176
    %s180 = sphi 0, %s179
    %s196 = sphi 0, %s180
    %s202 = sphi 0, %s204
    %s205 = sphi 0, %s202
    %s206 = sphi 0, %s205
    %s222 = sphi 0, %s206
    %s228 = sphi 0, %s230
    %s231 = sphi 0, %s228
    %s232 = sphi 0, %s231
    %s248 = sphi 0, %s232
    %s254 = sphi 0, %s256
    %s257 = sphi 0, %s254
    %s258 = sphi 0, %s257
    %s274 = sphi 0, %s258
    %s280 = sphi 0, %s282
    %s283 = sphi 0, %s280
    %s284 = sphi 0, %s283
    %s300 = sphi 0, %s284
    %s306 = sphi 0, %s308
    %s309 = sphi 0, %s306
    %s310 = sphi 0, %s309
    %s326 = sphi 0, %s310
    %s332 = sphi 0, %s334
    %s335 = sphi 0, %s332
    %s336 = sphi 0, %s335
    %s352 = sphi 0, %s336
    %s358 = sphi 0, %s360
    %s361 = sphi 0, %s358
    %s362 = sphi 0, %s361
    %s378 = sphi 0, %s362
    %s382 = sphi 0, %s382
    %s384 = sphi 0, %s382
    %s385 = sphi 0, %s384
    %s399 = sphi 0, %s385
  $region4: #{transformer_forward.1} parent=0 // loop_header_branch
    %23 = sbr.rel (%p21) target = $region8
  $region5: #{transformer_forward.1} parent=0 // loop_body
    %s25 = ssub.s32 %s20, 1
    %s26 = ssub.s32 %s20, 2
    %s27 = sadd.s32 %s20, 1
    %s29 = sadd.s32 %s28, 1
    %p32 = scmp.eq.s32.totalorder %s20, 1
    %p33 = scmp.ne.s32.totalorder %s28, %s30
    %p34 = scmp.eq.s32.totalorder %s20, 0
    %p35 = por %p33, %p34
    %p36 = scmp.ne.s32.totalorder %s28, %s30
    %p37 = scmp.eq.s32.totalorder %s25, 1
    %p38 = por %p36, %p37
    %p39 = scmp.ne.s32.totalorder %s30, %s31
    %p40 = scmp.eq.s32.totalorder %s25, 0
    %p41 = por %p39, %p40
    %p42 = scmp.ne.s32.totalorder %s30, %s31
    %p43 = scmp.eq.s32.totalorder %s26, 1
    %p44 = por %p42, %p43
    %p46 = scmp.ne.s32.totalorder %s31, %s45
    %p47 = scmp.eq.s32.totalorder %s26, 0
    %p48 = por %p46, %p47
    %s50 = sadd.s32 %s49, 1
    %p53 = scmp.eq.s32.totalorder %s20, 1
    %p54 = scmp.ne.s32.totalorder %s49, %s51
    %p55 = scmp.eq.s32.totalorder %s20, 0
    %p56 = por %p54, %p55
    %p57 = scmp.ne.s32.totalorder %s49, %s51
    %p58 = scmp.eq.s32.totalorder %s25, 1
    %p59 = por %p57, %p58
    %p60 = scmp.ne.s32.totalorder %s51, %s52
    %p61 = scmp.eq.s32.totalorder %s25, 0
    %p62 = por %p60, %p61
    %p63 = scmp.ne.s32.totalorder %s51, %s52
    %p64 = scmp.eq.s32.totalorder %s26, 1
    %p65 = por %p63, %p64
    %p67 = scmp.ne.s32.totalorder %s52, %s66
    %p68 = scmp.eq.s32.totalorder %s26, 0
    %p69 = por %p67, %p68
    %s70 = ssub.s32 %s20, %s27
    %p71 = scmp.eq.s32.totalorder %s70, 0
    %s73 = sadd.s32 %s72, 1
    %s74 = scalar_select %p71, %s72, %s73
    %p77 = pneg %p71
    %p78 = scmp.eq.s32.totalorder %s20, 1
    %p79 = por %p77, %p78
    %p80 = scmp.ne.s32.totalorder %s72, %s75
    %p81 = scmp.eq.s32.totalorder %s20, 0
    %p82 = por %p80, %p81
    %p83 = scmp.ne.s32.totalorder %s72, %s75
    %p84 = scmp.eq.s32.totalorder %s25, 1
    %p85 = por %p83, %p84
    %p86 = scmp.ne.s32.totalorder %s75, %s76
    %p87 = scmp.eq.s32.totalorder %s25, 0
    %p88 = por %p86, %p87
    %p89 = scmp.ne.s32.totalorder %s75, %s76
    %p90 = scmp.eq.s32.totalorder %s26, 1
    %p91 = por %p89, %p90
    %p93 = scmp.ne.s32.totalorder %s76, %s92
    %p94 = scmp.eq.s32.totalorder %s26, 0
    %p95 = por %p93, %p94
    %s96 = ssub.s32 %s20, %s27
    %p97 = scmp.eq.s32.totalorder %s96, 0
    %s99 = sadd.s32 %s98, 1
    %s100 = scalar_select %p97, %s98, %s99
    %p103 = pneg %p97
    %p104 = scmp.eq.s32.totalorder %s20, 1
    %p105 = por %p103, %p104
    %p106 = scmp.ne.s32.totalorder %s98, %s101
    %p107 = scmp.eq.s32.totalorder %s20, 0
    %p108 = por %p106, %p107
    %p109 = scmp.ne.s32.totalorder %s98, %s101
    %p110 = scmp.eq.s32.totalorder %s25, 1
    %p111 = por %p109, %p110
    %p112 = scmp.ne.s32.totalorder %s101, %s102
    %p113 = scmp.eq.s32.totalorder %s25, 0
    %p114 = por %p112, %p113
    %p115 = scmp.ne.s32.totalorder %s101, %s102
    %p116 = scmp.eq.s32.totalorder %s26, 1
    %p117 = por %p115, %p116
    %p119 = scmp.ne.s32.totalorder %s102, %s118
    %p120 = scmp.eq.s32.totalorder %s26, 0
    %p121 = por %p119, %p120
    %s122 = ssub.s32 %s20, %s27
    %p123 = scmp.eq.s32.totalorder %s122, 0
    %s125 = sadd.s32 %s124, 1
    %s126 = scalar_select %p123, %s124, %s125
    %p129 = pneg %p123
    %p130 = scmp.eq.s32.totalorder %s20, 1
    %p131 = por %p129, %p130
    %p132 = scmp.ne.s32.totalorder %s124, %s127
    %p133 = scmp.eq.s32.totalorder %s20, 0
    %p134 = por %p132, %p133
    %p135 = scmp.ne.s32.totalorder %s124, %s127
    %p136 = scmp.eq.s32.totalorder %s25, 1
    %p137 = por %p135, %p136
    %p138 = scmp.ne.s32.totalorder %s127, %s128
    %p139 = scmp.eq.s32.totalorder %s25, 0
    %p140 = por %p138, %p139
    %p141 = scmp.ne.s32.totalorder %s127, %s128
    %p142 = scmp.eq.s32.totalorder %s26, 1
    %p143 = por %p141, %p142
    %p145 = scmp.ne.s32.totalorder %s128, %s144
    %p146 = scmp.eq.s32.totalorder %s26, 0
    %p147 = por %p145, %p146
    %s148 = ssub.s32 %s20, %s27
    %p149 = scmp.eq.s32.totalorder %s148, 0
    %s151 = sadd.s32 %s150, 1
    %s152 = scalar_select %p149, %s150, %s151
    %p155 = pneg %p149
    %p156 = scmp.eq.s32.totalorder %s20, 1
    %p157 = por %p155, %p156
    %p158 = scmp.ne.s32.totalorder %s150, %s153
    %p159 = scmp.eq.s32.totalorder %s20, 0
    %p160 = por %p158, %p159
    %p161 = scmp.ne.s32.totalorder %s150, %s153
    %p162 = scmp.eq.s32.totalorder %s25, 1
    %p163 = por %p161, %p162
    %p164 = scmp.ne.s32.totalorder %s153, %s154
    %p165 = scmp.eq.s32.totalorder %s25, 0
    %p166 = por %p164, %p165
    %p167 = scmp.ne.s32.totalorder %s153, %s154
    %p168 = scmp.eq.s32.totalorder %s26, 1
    %p169 = por %p167, %p168
    %p171 = scmp.ne.s32.totalorder %s154, %s170
    %p172 = scmp.eq.s32.totalorder %s26, 0
    %p173 = por %p171, %p172
    %s174 = ssub.s32 %s20, %s27
    %p175 = scmp.eq.s32.totalorder %s174, 0
    %s177 = sadd.s32 %s176, 1
    %s178 = scalar_select %p175, %s176, %s177
    %p181 = pneg %p175
    %p182 = scmp.eq.s32.totalorder %s20, 1
    %p183 = por %p181, %p182
    %p184 = scmp.ne.s32.totalorder %s176, %s179
    %p185 = scmp.eq.s32.totalorder %s20, 0
    %p186 = por %p184, %p185
    %p187 = scmp.ne.s32.totalorder %s176, %s179
    %p188 = scmp.eq.s32.totalorder %s25, 1
    %p189 = por %p187, %p188
    %p190 = scmp.ne.s32.totalorder %s179, %s180
    %p191 = scmp.eq.s32.totalorder %s25, 0
    %p192 = por %p190, %p191
    %p193 = scmp.ne.s32.totalorder %s179, %s180
    %p194 = scmp.eq.s32.totalorder %s26, 1
    %p195 = por %p193, %p194
    %p197 = scmp.ne.s32.totalorder %s180, %s196
    %p198 = scmp.eq.s32.totalorder %s26, 0
    %p199 = por %p197, %p198
    %s200 = ssub.s32 %s20, %s27
    %p201 = scmp.eq.s32.totalorder %s200, 0
    %s203 = sadd.s32 %s202, 1
    %s204 = scalar_select %p201, %s202, %s203
    %p207 = pneg %p201
    %p208 = scmp.eq.s32.totalorder %s20, 1
    %p209 = por %p207, %p208
    %p210 = scmp.ne.s32.totalorder %s202, %s205
    %p211 = scmp.eq.s32.totalorder %s20, 0
    %p212 = por %p210, %p211
    %p213 = scmp.ne.s32.totalorder %s202, %s205
    %p214 = scmp.eq.s32.totalorder %s25, 1
    %p215 = por %p213, %p214
    %p216 = scmp.ne.s32.totalorder %s205, %s206
    %p217 = scmp.eq.s32.totalorder %s25, 0
    %p218 = por %p216, %p217
    %p219 = scmp.ne.s32.totalorder %s205, %s206
    %p220 = scmp.eq.s32.totalorder %s26, 1
    %p221 = por %p219, %p220
    %p223 = scmp.ne.s32.totalorder %s206, %s222
    %p224 = scmp.eq.s32.totalorder %s26, 0
    %p225 = por %p223, %p224
    %s226 = ssub.s32 %s20, %s27
    %p227 = scmp.eq.s32.totalorder %s226, 0
    %s229 = sadd.s32 %s228, 1
    %s230 = scalar_select %p227, %s228, %s229
    %p233 = pneg %p227
    %p234 = scmp.eq.s32.totalorder %s20, 1
    %p235 = por %p233, %p234
    %p236 = scmp.ne.s32.totalorder %s228, %s231
    %p237 = scmp.eq.s32.totalorder %s20, 0
    %p238 = por %p236, %p237
    %p239 = scmp.ne.s32.totalorder %s228, %s231
    %p240 = scmp.eq.s32.totalorder %s25, 1
    %p241 = por %p239, %p240
    %p242 = scmp.ne.s32.totalorder %s231, %s232
    %p243 = scmp.eq.s32.totalorder %s25, 0
    %p244 = por %p242, %p243
    %p245 = scmp.ne.s32.totalorder %s231, %s232
    %p246 = scmp.eq.s32.totalorder %s26, 1
    %p247 = por %p245, %p246
    %p249 = scmp.ne.s32.totalorder %s232, %s248
    %p250 = scmp.eq.s32.totalorder %s26, 0
    %p251 = por %p249, %p250
    %s252 = ssub.s32 %s20, %s27
    %p253 = scmp.eq.s32.totalorder %s252, 0
    %s255 = sadd.s32 %s254, 1
    %s256 = scalar_select %p253, %s254, %s255
    %p259 = pneg %p253
    %p260 = scmp.eq.s32.totalorder %s20, 1
    %p261 = por %p259, %p260
    %p262 = scmp.ne.s32.totalorder %s254, %s257
    %p263 = scmp.eq.s32.totalorder %s20, 0
    %p264 = por %p262, %p263
    %p265 = scmp.ne.s32.totalorder %s254, %s257
    %p266 = scmp.eq.s32.totalorder %s25, 1
    %p267 = por %p265, %p266
    %p268 = scmp.ne.s32.totalorder %s257, %s258
    %p269 = scmp.eq.s32.totalorder %s25, 0
    %p270 = por %p268, %p269
    %p271 = scmp.ne.s32.totalorder %s257, %s258
    %p272 = scmp.eq.s32.totalorder %s26, 1
    %p273 = por %p271, %p272
    %p275 = scmp.ne.s32.totalorder %s258, %s274
    %p276 = scmp.eq.s32.totalorder %s26, 0
    %p277 = por %p275, %p276
    %s278 = ssub.s32 %s20, %s27
    %p279 = scmp.eq.s32.totalorder %s278, 0
    %s281 = sadd.s32 %s280, 1
    %s282 = scalar_select %p279, %s280, %s281
    %p285 = pneg %p279
    %p286 = scmp.eq.s32.totalorder %s20, 1
    %p287 = por %p285, %p286
    %p288 = scmp.ne.s32.totalorder %s280, %s283
    %p289 = scmp.eq.s32.totalorder %s20, 0
    %p290 = por %p288, %p289
    %p291 = scmp.ne.s32.totalorder %s280, %s283
    %p292 = scmp.eq.s32.totalorder %s25, 1
    %p293 = por %p291, %p292
    %p294 = scmp.ne.s32.totalorder %s283, %s284
    %p295 = scmp.eq.s32.totalorder %s25, 0
    %p296 = por %p294, %p295
    %p297 = scmp.ne.s32.totalorder %s283, %s284
    %p298 = scmp.eq.s32.totalorder %s26, 1
    %p299 = por %p297, %p298
    %p301 = scmp.ne.s32.totalorder %s284, %s300
    %p302 = scmp.eq.s32.totalorder %s26, 0
    %p303 = por %p301, %p302
    %s304 = ssub.s32 %s20, %s27
    %p305 = scmp.eq.s32.totalorder %s304, 0
    %s307 = sadd.s32 %s306, 1
    %s308 = scalar_select %p305, %s306, %s307
    %p311 = pneg %p305
    %p312 = scmp.eq.s32.totalorder %s20, 1
    %p313 = por %p311, %p312
    %p314 = scmp.ne.s32.totalorder %s306, %s309
    %p315 = scmp.eq.s32.totalorder %s20, 0
    %p316 = por %p314, %p315
    %p317 = scmp.ne.s32.totalorder %s306, %s309
    %p318 = scmp.eq.s32.totalorder %s25, 1
    %p319 = por %p317, %p318
    %p320 = scmp.ne.s32.totalorder %s309, %s310
    %p321 = scmp.eq.s32.totalorder %s25, 0
    %p322 = por %p320, %p321
    %p323 = scmp.ne.s32.totalorder %s309, %s310
    %p324 = scmp.eq.s32.totalorder %s26, 1
    %p325 = por %p323, %p324
    %p327 = scmp.ne.s32.totalorder %s310, %s326
    %p328 = scmp.eq.s32.totalorder %s26, 0
    %p329 = por %p327, %p328
    %s330 = ssub.s32 %s20, %s27
    %p331 = scmp.eq.s32.totalorder %s330, 0
    %s333 = sadd.s32 %s332, 1
    %s334 = scalar_select %p331, %s332, %s333
    %p337 = pneg %p331
    %p338 = scmp.eq.s32.totalorder %s20, 1
    %p339 = por %p337, %p338
    %p340 = scmp.ne.s32.totalorder %s332, %s335
    %p341 = scmp.eq.s32.totalorder %s20, 0
    %p342 = por %p340, %p341
    %p343 = scmp.ne.s32.totalorder %s332, %s335
    %p344 = scmp.eq.s32.totalorder %s25, 1
    %p345 = por %p343, %p344
    %p346 = scmp.ne.s32.totalorder %s335, %s336
    %p347 = scmp.eq.s32.totalorder %s25, 0
    %p348 = por %p346, %p347
    %p349 = scmp.ne.s32.totalorder %s335, %s336
    %p350 = scmp.eq.s32.totalorder %s26, 1
    %p351 = por %p349, %p350
    %p353 = scmp.ne.s32.totalorder %s336, %s352
    %p354 = scmp.eq.s32.totalorder %s26, 0
    %p355 = por %p353, %p354
    %s356 = ssub.s32 %s20, %s27
    %p357 = scmp.eq.s32.totalorder %s356, 0
    %s359 = sadd.s32 %s358, 1
    %s360 = scalar_select %p357, %s358, %s359
    %p363 = pneg %p357
    %p364 = scmp.eq.s32.totalorder %s20, 1
    %p365 = por %p363, %p364
    %p366 = scmp.ne.s32.totalorder %s358, %s361
    %p367 = scmp.eq.s32.totalorder %s20, 0
    %p368 = por %p366, %p367
    %p369 = scmp.ne.s32.totalorder %s358, %s361
    %p370 = scmp.eq.s32.totalorder %s25, 1
    %p371 = por %p369, %p370
    %p372 = scmp.ne.s32.totalorder %s361, %s362
    %p373 = scmp.eq.s32.totalorder %s25, 0
    %p374 = por %p372, %p373
    %p375 = scmp.ne.s32.totalorder %s361, %s362
    %p376 = scmp.eq.s32.totalorder %s26, 1
    %p377 = por %p375, %p376
    %p379 = scmp.ne.s32.totalorder %s362, %s378
    %p380 = scmp.eq.s32.totalorder %s26, 0
    %p381 = por %p379, %p380
    %s383 = sadd.s32 %s382, 1
    %p386 = scmp.eq.s32.totalorder %s20, 1
    %p387 = scmp.ne.s32.totalorder %s382, %s384
    %p388 = scmp.eq.s32.totalorder %s20, 0
    %p389 = por %p387, %p388
    %p390 = scmp.ne.s32.totalorder %s382, %s384
    %p391 = scmp.eq.s32.totalorder %s25, 1
    %p392 = por %p390, %p391
    %p393 = scmp.ne.s32.totalorder %s384, %s385
    %p394 = scmp.eq.s32.totalorder %s25, 0
    %p395 = por %p393, %p394
    %p396 = scmp.ne.s32.totalorder %s384, %s385
    %p397 = scmp.eq.s32.totalorder %s26, 1
    %p398 = por %p396, %p397
    %p400 = scmp.ne.s32.totalorder %s385, %s399
    %p401 = scmp.eq.s32.totalorder %s26, 0
    %p402 = por %p400, %p401
    %p403 = scmp.le.s32.totalorder 1, %s20
    %p404 = scmp.lt.s32.totalorder %s20, 3
    %p405 = pnand %p403, %p404
    %p406 = pneg %p405
    // Predicated region
    $region9: #{transformer_forward.1} parent=5 // pred_check
      _
    $region10: #{transformer_forward.1} parent=5 // pred_check_branch
      %408 = sbr.rel (%p405) target = $region12
    $region11: #{transformer_forward.1} parent=5 // pred_region
      %s409 = ssub.s32 %s20, 1
      // Predicated region
      $region13: #{transformer_forward.1} parent=11 // pred_check
        %p410 = pneg %p41
      $region14: #{transformer_forward.1} parent=11 // pred_check_branch
        %412 = sbr.rel (%p410) target = $region16
      $region15: #{transformer_forward.1} parent=11 // pred_region
        _
      $region16: #{transformer_forward.1} parent=11 // pred_fallthru
        _
      // Predicated region
      $region17: #{transformer_forward.1} parent=11 // pred_check
        %p413 = pneg %p62
      $region18: #{transformer_forward.1} parent=11 // pred_check_branch
        %415 = sbr.rel (%p413) target = $region20
      $region19: #{transformer_forward.1} parent=11 // pred_region
        _
      $region20: #{transformer_forward.1} parent=11 // pred_fallthru
        _
    $region12: #{transformer_forward.1} parent=5 // pred_fallthru
      _
    %p416 = scmp.lt.s32.totalorder %s20, 2
    // Predicated region
    $region21: #{transformer_forward.1} parent=5 // pred_check
      %p417 = pneg %p416
    $region22: #{transformer_forward.1} parent=5 // pred_check_branch
      %419 = sbr.rel (%p417) target = $region24
    $region23: #{transformer_forward.1} parent=5 // pred_region
      // Predicated region
      $region25: #{transformer_forward.1} parent=23 // pred_check
        %p420 = pneg %p82
      $region26: #{transformer_forward.1} parent=23 // pred_check_branch
        %422 = sbr.rel (%p420) target = $region28
      $region27: #{transformer_forward.1} parent=23 // pred_region
        %p423 = scmp.lt.s32.totalorder %s20, 1
        %s424 = scalar_select %p423, %s20, 1
        %s425 = scalar_lea.vmem %s2, %s424
      $region28: #{transformer_forward.1} parent=23 // pred_fallthru
        _
      // Predicated region
      $region29: #{transformer_forward.1} parent=23 // pred_check
        %p426 = pneg %p108
      $region30: #{transformer_forward.1} parent=23 // pred_check_branch
        %428 = sbr.rel (%p426) target = $region32
      $region31: #{transformer_forward.1} parent=23 // pred_region
        %p429 = scmp.lt.s32.totalorder %s20, 1
        %s430 = scalar_select %p429, %s20, 1
        %s431 = scalar_lea.vmem %s3, %s430
      $region32: #{transformer_forward.1} parent=23 // pred_fallthru
        _
      // Predicated region
      $region33: #{transformer_forward.1} parent=23 // pred_check
        %p432 = pneg %p134
      $region34: #{transformer_forward.1} parent=23 // pred_check_branch
        %434 = sbr.rel (%p432) target = $region36
      $region35: #{transformer_forward.1} parent=23 // pred_region
        %p435 = scmp.lt.s32.totalorder %s20, 1
        %s436 = scalar_select %p435, %s20, 1
        %s437 = smul.addr %s436, 48
        %s438 = smul.addr %s437, 4
        %s439 = scalar_lea.vmem %s4, %s438
      $region36: #{transformer_forward.1} parent=23 // pred_fallthru
        _
      // Predicated region
      $region37: #{transformer_forward.1} parent=23 // pred_check
        %p440 = pneg %p160
      $region38: #{transformer_forward.1} parent=23 // pred_check_branch
        %442 = sbr.rel (%p440) target = $region40
      $region39: #{transformer_forward.1} parent=23 // pred_region
        %p443 = scmp.lt.s32.totalorder %s20, 1
        %s444 = scalar_select %p443, %s20, 1
        %s445 = smul.addr %s444, 3
        %s446 = scalar_lea.vmem %s5, %s445
      $region40: #{transformer_forward.1} parent=23 // pred_fallthru
        _
      // Predicated region
      $region41: #{transformer_forward.1} parent=23 // pred_check
        %p447 = pneg %p186
      $region42: #{transformer_forward.1} parent=23 // pred_check_branch
        %449 = sbr.rel (%p447) target = $region44
      $region43: #{transformer_forward.1} parent=23 // pred_region
        %p450 = scmp.lt.s32.totalorder %s20, 1
        %s451 = scalar_select %p450, %s20, 1
        %s452 = smul.addr %s451, 16
        %s453 = smul.addr %s452, 4
        %s454 = scalar_lea.vmem %s6, %s453
      $region44: #{transformer_forward.1} parent=23 // pred_fallthru
        _
      // Predicated region
      $region45: #{transformer_forward.1} parent=23 // pred_check
        %p455 = pneg %p212
      $region46: #{transformer_forward.1} parent=23 // pred_check_branch
        %457 = sbr.rel (%p455) target = $region48
      $region47: #{transformer_forward.1} parent=23 // pred_region
        %p458 = scmp.lt.s32.totalorder %s20, 1
        %s459 = scalar_select %p458, %s20, 1
        %s460 = scalar_lea.vmem %s7, %s459
      $region48: #{transformer_forward.1} parent=23 // pred_fallthru
        _
      // Predicated region
      $region49: #{transformer_forward.1} parent=23 // pred_check
        %p461 = pneg %p238
      $region50: #{transformer_forward.1} parent=23 // pred_check_branch
        %463 = sbr.rel (%p461) target = $region52
      $region51: #{transformer_forward.1} parent=23 // pred_region
        %p464 = scmp.lt.s32.totalorder %s20, 1
        %s465 = scalar_select %p464, %s20, 1
        %s466 = scalar_lea.vmem %s8, %s465
      $region52: #{transformer_forward.1} parent=23 // pred_fallthru
        _
      // Predicated region
      $region53: #{transformer_forward.1} parent=23 // pred_check
        %p467 = pneg %p264
      $region54: #{transformer_forward.1} parent=23 // pred_check_branch
        %469 = sbr.rel (%p467) target = $region56
      $region55: #{transformer_forward.1} parent=23 // pred_region
        %p470 = scmp.lt.s32.totalorder %s20, 1
        %s471 = scalar_select %p470, %s20, 1
        %s472 = scalar_lea.vmem %s9, %s471
      $region56: #{transformer_forward.1} parent=23 // pred_fallthru
        _
      // Predicated region
      $region57: #{transformer_forward.1} parent=23 // pred_check
        %p473 = pneg %p290
      $region58: #{transformer_forward.1} parent=23 // pred_check_branch
        %475 = sbr.rel (%p473) target = $region60
      $region59: #{transformer_forward.1} parent=23 // pred_region
        %p476 = scmp.lt.s32.totalorder %s20, 1
        %s477 = scalar_select %p476, %s20, 1
        %s478 = smul.addr %s477, 16
        %s479 = smul.addr %s478, 4
        %s480 = scalar_lea.vmem %s10, %s479
      $region60: #{transformer_forward.1} parent=23 // pred_fallthru
        _
      // Predicated region
      $region61: #{transformer_forward.1} parent=23 // pred_check
        %p481 = pneg %p316
      $region62: #{transformer_forward.1} parent=23 // pred_check_branch
        %483 = sbr.rel (%p481) target = $region64
      $region63: #{transformer_forward.1} parent=23 // pred_region
        %p484 = scmp.lt.s32.totalorder %s20, 1
        %s485 = scalar_select %p484, %s20, 1
        %s486 = scalar_lea.vmem %s11, %s485
      $region64: #{transformer_forward.1} parent=23 // pred_fallthru
        _
      // Predicated region
      $region65: #{transformer_forward.1} parent=23 // pred_check
        %p487 = pneg %p342
      $region66: #{transformer_forward.1} parent=23 // pred_check_branch
        %489 = sbr.rel (%p487) target = $region68
      $region67: #{transformer_forward.1} parent=23 // pred_region
        %p490 = scmp.lt.s32.totalorder %s20, 1
        %s491 = scalar_select %p490, %s20, 1
        %s492 = smul.addr %s491, 16
        %s493 = smul.addr %s492, 4
        %s494 = scalar_lea.vmem %s12, %s493
      $region68: #{transformer_forward.1} parent=23 // pred_fallthru
        _
      // Predicated region
      $region69: #{transformer_forward.1} parent=23 // pred_check
        %p495 = pneg %p368
      $region70: #{transformer_forward.1} parent=23 // pred_check_branch
        %497 = sbr.rel (%p495) target = $region72
      $region71: #{transformer_forward.1} parent=23 // pred_region
        %p498 = scmp.lt.s32.totalorder %s20, 1
        %s499 = scalar_select %p498, %s20, 1
        %s500 = scalar_lea.vmem %s13, %s499
      $region72: #{transformer_forward.1} parent=23 // pred_fallthru
        _
    $region24: #{transformer_forward.1} parent=5 // pred_fallthru
      _
    %p501 = scmp.le.s32.totalorder 1, %s20
    %p502 = scmp.lt.s32.totalorder %s20, 3
    %p503 = pnand %p501, %p502
    %p504 = pneg %p503
    // Predicated region
    $region73: #{transformer_forward.1} parent=5 // pred_check
      _
    $region74: #{transformer_forward.1} parent=5 // pred_check_branch
      %506 = sbr.rel (%p503) target = $region76
    $region75: #{transformer_forward.1} parent=5 // pred_region
      %s507 = ssub.s32 %s20, 1
      %p508 = pneg %p41
      %p509 = pneg %p38
      %p510 = pneg %p62
      %p511 = pneg %p59
      %p512 = scmp.lt.s32.totalorder %s25, 1
      %s513 = scalar_select %p512, %s25, 1
      %s514 = scalar_lea.vmem %s2, %s513
      %p515 = pneg %p88
      %p516 = pneg %p85
      %p517 = scmp.lt.s32.totalorder %s25, 1
      %s518 = scalar_select %p517, %s25, 1
      %s519 = scalar_lea.vmem %s3, %s518
      %p520 = pneg %p114
      %p521 = pneg %p111
      %p522 = scmp.lt.s32.totalorder %s25, 1
      %s523 = scalar_select %p522, %s25, 1
      %s524 = smul.addr %s523, 48
      %s525 = smul.addr %s524, 4
      %s526 = scalar_lea.vmem %s4, %s525
      %p527 = pneg %p140
      %p528 = pneg %p137
      %p529 = scmp.lt.s32.totalorder %s25, 1
      %s530 = scalar_select %p529, %s25, 1
      %s531 = smul.addr %s530, 3
      %s532 = scalar_lea.vmem %s5, %s531
      %p533 = pneg %p166
      %p534 = pneg %p163
      %p535 = scmp.lt.s32.totalorder %s25, 1
      %s536 = scalar_select %p535, %s25, 1
      %s537 = smul.addr %s536, 16
      %s538 = smul.addr %s537, 4
      %s539 = scalar_lea.vmem %s6, %s538
      %p540 = pneg %p192
      %p541 = pneg %p189
      %p542 = scmp.lt.s32.totalorder %s25, 1
      %s543 = scalar_select %p542, %s25, 1
      %s544 = scalar_lea.vmem %s7, %s543
      %p545 = pneg %p218
      %p546 = pneg %p215
      %p547 = scmp.lt.s32.totalorder %s25, 1
      %s548 = scalar_select %p547, %s25, 1
      %s549 = scalar_lea.vmem %s8, %s548
      %p550 = pneg %p244
      %p551 = pneg %p241
      %p552 = scmp.lt.s32.totalorder %s25, 1
      %s553 = scalar_select %p552, %s25, 1
      %s554 = scalar_lea.vmem %s9, %s553
      %p555 = pneg %p270
      %p556 = pneg %p267
      %p557 = scmp.lt.s32.totalorder %s25, 1
      %s558 = scalar_select %p557, %s25, 1
      %s559 = smul.addr %s558, 16
      %s560 = smul.addr %s559, 4
      %s561 = scalar_lea.vmem %s10, %s560
      %p562 = pneg %p296
      %p563 = pneg %p293
      %p564 = scmp.lt.s32.totalorder %s25, 1
      %s565 = scalar_select %p564, %s25, 1
      %s566 = scalar_lea.vmem %s11, %s565
      %p567 = pneg %p322
      %p568 = pneg %p319
      %p569 = scmp.lt.s32.totalorder %s25, 1
      %s570 = scalar_select %p569, %s25, 1
      %s571 = smul.addr %s570, 16
      %s572 = smul.addr %s571, 4
      %s573 = scalar_lea.vmem %s12, %s572
      %p574 = pneg %p348
      %p575 = pneg %p345
      %p576 = scmp.lt.s32.totalorder %s25, 1
      %s577 = scalar_select %p576, %s25, 1
      %s578 = scalar_lea.vmem %s13, %s577
      %p579 = pneg %p374
      %p580 = pneg %p371
      %p581 = pneg %p395
      %p582 = pneg %p392
      %p583 = scmp.lt.s32.totalorder %s25, 1
      %s584 = scalar_select %p583, %s25, 1
      %s585 = scalar_lea.vmem %s2, %s584
      %p586 = scmp.lt.s32.totalorder %s25, 1
      %s587 = scalar_select %p586, %s25, 1
      %s588 = scalar_lea.vmem %s3, %s587
      %p589 = scmp.lt.s32.totalorder %s25, 1
      %s590 = scalar_select %p589, %s25, 1
      %s591 = smul.addr %s590, 48
      %s592 = smul.addr %s591, 4
      %s593 = scalar_lea.vmem %s4, %s592
      %p594 = scmp.lt.s32.totalorder %s25, 1
      %s595 = scalar_select %p594, %s25, 1
      %s596 = smul.addr %s595, 3
      %s597 = scalar_lea.vmem %s5, %s596
      %p598 = scmp.lt.s32.totalorder %s25, 1
      %s599 = scalar_select %p598, %s25, 1
      %s600 = smul.addr %s599, 16
      %s601 = smul.addr %s600, 4
      %s602 = scalar_lea.vmem %s6, %s601
      %p603 = scmp.lt.s32.totalorder %s25, 1
      %s604 = scalar_select %p603, %s25, 1
      %s605 = scalar_lea.vmem %s7, %s604
      %p606 = scmp.lt.s32.totalorder %s25, 1
      %s607 = scalar_select %p606, %s25, 1
      %s608 = scalar_lea.vmem %s8, %s607
      %p609 = scmp.lt.s32.totalorder %s25, 1
      %s610 = scalar_select %p609, %s25, 1
      %s611 = scalar_lea.vmem %s9, %s610
      %p612 = scmp.lt.s32.totalorder %s25, 1
      %s613 = scalar_select %p612, %s25, 1
      %s614 = smul.addr %s613, 16
      %s615 = smul.addr %s614, 4
      %s616 = scalar_lea.vmem %s10, %s615
      %p617 = scmp.lt.s32.totalorder %s25, 1
      %s618 = scalar_select %p617, %s25, 1
      %s619 = scalar_lea.vmem %s11, %s618
      %p620 = scmp.lt.s32.totalorder %s25, 1
      %s621 = scalar_select %p620, %s25, 1
      %s622 = smul.addr %s621, 16
      %s623 = smul.addr %s622, 4
      %s624 = scalar_lea.vmem %s12, %s623
      %p625 = scmp.lt.s32.totalorder %s25, 1
      %s626 = scalar_select %p625, %s25, 1
      %s627 = scalar_lea.vmem %s13, %s626
      %p629 = scmp.eq.s32.totalorder %s25, 0
      // Predicated region
      $region77: #{transformer_forward.1} parent=75 // pred_check
        %p630 = pneg %p629
      $region78: #{transformer_forward.1} parent=75 // pred_check_branch
        %632 = sbr.rel (%p630) target = $region80
      $region79: #{transformer_forward.1} parent=75 // pred_region
        %v633 = vld [vmem:[%s0] sm:$0xff]
        %v634 = vld [vmem:[%s0 + $0x8] sm:$0xff]
        %635 = vst [vmem:[%s14] sm:$0xff] %v633
        %636 = vst [vmem:[%s14 + $0x8] sm:$0xff] %v634
      $region80: #{transformer_forward.1} parent=75 // pred_fallthru
        _
      %v637 = vld [vmem:[%s14] sm:$0xff]
      %v638 = vld [vmem:[%s14 + $0x8] sm:$0xff]
      %v639 = vld [vmem:[%s585] sm:$0x1]
      %v640 = vld [vmem:[%s588] sm:$0x1]
      %641 = vadd.xlane.f32.xlu0 %v637
      %v642 = vpop.xlane.xlu0 %641
      %643 = vadd.xlane.f32.xlu0 %v638
      %v644 = vpop.xlane.xlu0 %643
      %v645 = vmul.f32 %v642, 0.03125
      %v646 = vmul.f32 %v644, 0.03125
      %v647 = vmul.f32 %v637, %v637
      %v648 = vmul.f32 %v638, %v638
      %649 = vadd.xlane.f32.xlu0 %v647
      %v650 = vpop.xlane.xlu0 %649
      %651 = vadd.xlane.f32.xlu0 %v648
      %v652 = vpop.xlane.xlu0 %651
      %v653 = vmul.f32 %v650, 0.03125
      %v654 = vmul.f32 %v652, 0.03125
      %v655 = vmul.f32 %v645, %v645
      %v656 = vmul.f32 %v646, %v646
      %v657 = vsub.f32 %v653, %v655
      %v658 = vsub.f32 %v654, %v656
      %v659 = vsub.f32 %v637, %v645
      %v660 = vsub.f32 %v638, %v646
      %v661 = vadd.f32 %v657, 1e-05
      %v662 = vadd.f32 %v658, 1e-05
      %v663 = vrsqrt.pop %v661
      %v664 = vmul.f32 %v663, %v661
      %v665 = vmul.f32 %v664, %v663
      %v666 = vmul.f32 0.5, %v665
      %v667 = vsub.f32 1.5, %v666
      %v668 = vmul.f32 %v663, %v667
      %vm669 = vweird.f32 %v661
      %vm670 = vweird.f32 %v663
      %vm671 = vmor %vm669, %vm670
      %v672 = vsel %vm671, %v663, %v668
      %v673 = vrsqrt.pop %v662
      %v674 = vmul.f32 %v673, %v662
      %v675 = vmul.f32 %v674, %v673
      %v676 = vmul.f32 0.5, %v675
      %v677 = vsub.f32 1.5, %v676
      %v678 = vmul.f32 %v673, %v677
      %vm679 = vweird.f32 %v662
      %vm680 = vweird.f32 %v673
      %vm681 = vmor %vm679, %vm680
      %v682 = vsel %vm681, %v673, %v678
      %v683 = vmul.f32 %v659, %v672
      %v684 = vmul.f32 %v660, %v682
      %v686 = vperm.slane %v639, 0
      %v688 = vmul.f32 %v683, %v686
      %v689 = vmul.f32 %v684, %v686
      %v691 = vperm.slane %v640, 0
      %v693 = vadd.f32 %v688, %v691
      %v694 = vadd.f32 %v689, %v691
      %v695 = vpack.c.bf16 %v694, %v693
      %v696 = vld [vmem:[%s593] sm:$0xff]
      %v697 = vld [vmem:[%s593 + $0x8] sm:$0xf]
      %v698 = vld [vmem:[%s593 + $0xc] sm:$0xff]
      %v699 = vld [vmem:[%s593 + $0x14] sm:$0xf]
      %v700 = vld [vmem:[%s593 + $0x18] sm:$0xff]
      %v701 = vld [vmem:[%s593 + $0x20] sm:$0xf]
      %v702 = vld [vmem:[%s593 + $0x24] sm:$0xff]
      %v703 = vld [vmem:[%s593 + $0x2c] sm:$0xf]
      %v704 = vld [vmem:[%s593 + $0x30] sm:$0xff]
      %v705 = vld [vmem:[%s593 + $0x38] sm:$0xf]
      %v706 = vld [vmem:[%s593 + $0x3c] sm:$0xff]
      %v707 = vld [vmem:[%s593 + $0x44] sm:$0xf]
      %v708 = vld [vmem:[%s593 + $0x48] sm:$0xff]
      %v709 = vld [vmem:[%s593 + $0x50] sm:$0xf]
      %v710 = vld [vmem:[%s593 + $0x54] sm:$0xff]
      %v711 = vld [vmem:[%s593 + $0x5c] sm:$0xf]
      %v712 = vld [vmem:[%s593 + $0x60] sm:$0xff]
      %v713 = vld [vmem:[%s593 + $0x68] sm:$0xf]
      %v714 = vld [vmem:[%s593 + $0x6c] sm:$0xff]
      %v715 = vld [vmem:[%s593 + $0x74] sm:$0xf]
      %v716 = vld [vmem:[%s593 + $0x78] sm:$0xff]
      %v717 = vld [vmem:[%s593 + $0x80] sm:$0xf]
      %v718 = vld [vmem:[%s593 + $0x84] sm:$0xff]
      %v719 = vld [vmem:[%s593 + $0x8c] sm:$0xf]
      %v720 = vld [vmem:[%s593 + $0x90] sm:$0xff]
      %v721 = vld [vmem:[%s593 + $0x98] sm:$0xf]
      %v722 = vld [vmem:[%s593 + $0x9c] sm:$0xff]
      %v723 = vld [vmem:[%s593 + $0xa4] sm:$0xf]
      %v724 = vld [vmem:[%s593 + $0xa8] sm:$0xff]
      %v725 = vld [vmem:[%s593 + $0xb0] sm:$0xf]
      %v726 = vld [vmem:[%s593 + $0xb4] sm:$0xff]
      %v727 = vld [vmem:[%s593 + $0xbc] sm:$0xf]
      %v728 = vld [vmem:[%s597] sm:$0x7]
      %v730 = vperm.slane %v728, 0
      %v731 = vperm.slane %v728, 1
      %v732 = vperm.slane %v728, 2
      %v768 = vunpack.c.l.b16 %v696
      %v769 = vunpack.c.h.b16 %v696
      %v770 = vunpack.c.l.b16 %v697
      %v771 = vunpack.c.l.b16 %v698
      %v772 = vunpack.c.h.b16 %v698
      %v773 = vunpack.c.l.b16 %v699
      %v774 = vunpack.c.l.b16 %v700
      %v775 = vunpack.c.h.b16 %v700
      %v776 = vunpack.c.l.b16 %v701
      %v777 = vunpack.c.l.b16 %v702
      %v778 = vunpack.c.h.b16 %v702
      %v779 = vunpack.c.l.b16 %v703
      %v780 = vunpack.c.l.b16 %v704
      %v781 = vunpack.c.h.b16 %v704
      %v782 = vunpack.c.l.b16 %v705
      %v783 = vunpack.c.l.b16 %v706
      %v784 = vunpack.c.h.b16 %v706
      %v785 = vunpack.c.l.b16 %v707
      %v786 = vunpack.c.l.b16 %v708
      %v787 = vunpack.c.h.b16 %v708
      %v788 = vunpack.c.l.b16 %v709
      %v789 = vunpack.c.l.b16 %v710
      %v790 = vunpack.c.h.b16 %v710
      %v791 = vunpack.c.l.b16 %v711
      %v792 = vunpack.c.l.b16 %v712
      %v793 = vunpack.c.h.b16 %v712
      %v794 = vunpack.c.l.b16 %v713
      %v795 = vunpack.c.l.b16 %v714
      %v796 = vunpack.c.h.b16 %v714
      %v797 = vunpack.c.l.b16 %v715
      %v798 = vunpack.c.l.b16 %v716
      %v799 = vunpack.c.h.b16 %v716
      %v800 = vunpack.c.l.b16 %v717
      %v801 = vunpack.c.l.b16 %v718
      %v802 = vunpack.c.h.b16 %v718
      %v803 = vunpack.c.l.b16 %v719
      %v804 = vunpack.c.l.b16 %v720
      %v805 = vunpack.c.h.b16 %v720
      %v806 = vunpack.c.l.b16 %v721
      %v807 = vunpack.c.l.b16 %v722
      %v808 = vunpack.c.h.b16 %v722
      %v809 = vunpack.c.l.b16 %v723
      %v810 = vunpack.c.l.b16 %v724
      %v811 = vunpack.c.h.b16 %v724
      %v812 = vunpack.c.l.b16 %v725
      %v813 = vunpack.c.l.b16 %v726
      %v814 = vunpack.c.h.b16 %v726
      %v815 = vunpack.c.l.b16 %v727
      %v816 = vpack.c.b16 %v771, %v768
      %v817 = vpack.c.b16 %v772, %v769
      %v818 = vpack.c.b16 %v773, %v770
      %v819 = vpack.c.b16 %v777, %v774
      %v820 = vpack.c.b16 %v778, %v775
      %v821 = vpack.c.b16 %v779, %v776
      %v822 = vpack.c.b16 %v783, %v780
      %v823 = vpack.c.b16 %v784, %v781
      %v824 = vpack.c.b16 %v785, %v782
      %v825 = vpack.c.b16 %v789, %v786
      %v826 = vpack.c.b16 %v790, %v787
      %v827 = vpack.c.b16 %v791, %v788
      %v828 = vpack.c.b16 %v795, %v792
      %v829 = vpack.c.b16 %v796, %v793
      %v830 = vpack.c.b16 %v797, %v794
      %v831 = vpack.c.b16 %v801, %v798
      %v832 = vpack.c.b16 %v802, %v799
      %v833 = vpack.c.b16 %v803, %v800
      %v834 = vpack.c.b16 %v807, %v804
      %v835 = vpack.c.b16 %v808, %v805
      %v836 = vpack.c.b16 %v809, %v806
      %v837 = vpack.c.b16 %v813, %v810
      %v838 = vpack.c.b16 %v814, %v811
      %v839 = vpack.c.b16 %v815, %v812
      %864 = vmatpush.bf16.msra.mxu0 %v837
      %865 = vmatpush.bf16.msra.mxu0 %v834
      %866 = vmatpush.bf16.msra.mxu0 %v831
      %867 = vmatpush.bf16.msra.mxu0 %v828
      %868 = vmatpush.bf16.msra.mxu0 %v825
      %869 = vmatpush.bf16.msra.mxu0 %v822
      %870 = vmatpush.bf16.msra.mxu0 %v819
      %871 = vmatpush.bf16.msra.mxu0 %v816
      %872 = vmatmul.bf16.gmra.mxu0 %v695
      %v873 = vpop.f32.mrf.mxu0
      %v874 = vadd.f32 %v730, %v873
      %v875 = vpop.f32.mrf.mxu0
      %v876 = vadd.f32 %v730, %v875
      %877 = vdwg.mxu0
      %878 = vmatpush.bf16.msra.mxu0 %v838
      %879 = vmatpush.bf16.msra.mxu0 %v835
      %880 = vmatpush.bf16.msra.mxu0 %v832
      %881 = vmatpush.bf16.msra.mxu0 %v829
      %882 = vmatpush.bf16.msra.mxu0 %v826
      %883 = vmatpush.bf16.msra.mxu0 %v823
      %884 = vmatpush.bf16.msra.mxu0 %v820
      %885 = vmatpush.bf16.msra.mxu0 %v817
      %886 = vmatmul.bf16.gmra.mxu0 %v695
      %v887 = vpop.f32.mrf.mxu0
      %v888 = vadd.f32 %v731, %v887
      %v889 = vpop.f32.mrf.mxu0
      %v890 = vadd.f32 %v731, %v889
      %891 = vdwg.mxu0
      %892 = vmatpush.bf16.msra.mxu0 %v839
      %893 = vmatpush.bf16.msra.mxu0 %v836
      %894 = vmatpush.bf16.msra.mxu0 %v833
      %895 = vmatpush.bf16.msra.mxu0 %v830
      %896 = vmatpush.bf16.msra.mxu0 %v827
      %897 = vmatpush.bf16.msra.mxu0 %v824
      %898 = vmatpush.bf16.msra.mxu0 %v821
      %899 = vmatpush.bf16.msra.mxu0 %v818
      %900 = vmatmul.bf16.gmra.mxu0 %v695
      %v901 = vpop.f32.mrf.mxu0
      %v902 = vadd.f32 %v732, %v901
      %v903 = vpop.f32.mrf.mxu0
      %v904 = vadd.f32 %v732, %v903
      %905 = vdwg.mxu0
      %v906 = vpack.c.bf16 %v874, %v874
      %v907 = vpack.c.bf16 %v876, %v876
      %v908 = vpack.c.bf16 %v888, %v888
      %v909 = vpack.c.bf16 %v890, %v890
      %v910 = vpack.c.bf16 %v902, %v902
      %v911 = vpack.c.bf16 %v904, %v904
      %914 = vrot.lane.b32.xlu0 %v906, 96
      %v915 = vpop.permute.xlu0 %914
      %916 = vrot.lane.b32.xlu0 %v907, 96
      %v917 = vpop.permute.xlu0 %916
      %918 = vrot.lane.b32.xlu0 %v906, 64
      %v919 = vpop.permute.xlu0 %918
      %920 = vrot.lane.b32.xlu0 %v907, 64
      %v921 = vpop.permute.xlu0 %920
      %922 = vrot.lane.b32.xlu0 %v906, 32
      %v923 = vpop.permute.xlu0 %922
      %924 = vrot.lane.b32.xlu0 %v907, 32
      %v925 = vpop.permute.xlu0 %924
      %928 = vrot.lane.b32.xlu0 %v908, 96
      %v929 = vpop.permute.xlu0 %928
      %930 = vrot.lane.b32.xlu0 %v909, 96
      %v931 = vpop.permute.xlu0 %930
      %932 = vrot.lane.b32.xlu0 %v908, 64
      %v933 = vpop.permute.xlu0 %932
      %934 = vrot.lane.b32.xlu0 %v909, 64
      %v935 = vpop.permute.xlu0 %934
      %936 = vrot.lane.b32.xlu0 %v908, 32
      %v937 = vpop.permute.xlu0 %936
      %938 = vrot.lane.b32.xlu0 %v909, 32
      %v939 = vpop.permute.xlu0 %938
      %942 = vrot.lane.b32.xlu0 %v910, 96
      %v943 = vpop.permute.xlu0 %942
      %944 = vrot.lane.b32.xlu0 %v911, 96
      %v945 = vpop.permute.xlu0 %944
      %946 = vrot.lane.b32.xlu0 %v910, 64
      %v947 = vpop.permute.xlu0 %946
      %948 = vrot.lane.b32.xlu0 %v911, 64
      %v949 = vpop.permute.xlu0 %948
      %950 = vrot.lane.b32.xlu0 %v910, 32
      %v951 = vpop.permute.xlu0 %950
      %952 = vrot.lane.b32.xlu0 %v911, 32
      %v953 = vpop.permute.xlu0 %952
      %v954 = vld [vmem:[%s1] sm:$0xff]
      %v955 = vld [vmem:[%s1 + $0x8] sm:$0xff]
      %v956 = vunpack.c.l.b16 %v906
      %v957 = vunpack.c.l.b16 %v907
      %v958 = vpack.c.b16 %v957, %v956
      %v959 = vunpack.c.l.b16 %v908
      %v960 = vunpack.c.l.b16 %v909
      %v961 = vpack.c.b16 %v960, %v959
      %vm962 = vcmask 261120
      %v964 = vsel %vm962, %v958, 0
      %v967 = vsel %vm962, %v961, 0
      %969 = vmatpush.bf16.xpose.msra.mxu0 0
      %970 = vmatpush.bf16.xpose.msra.mxu0 0
      %971 = vmatpush.bf16.xpose.msra.mxu0 0
      %972 = vmatpush.bf16.xpose.msra.mxu0 0
      %973 = vmatpush.bf16.xpose.msra.mxu0 0
      %974 = vmatpush.bf16.xpose.msra.mxu0 0
      %975 = vmatpush.bf16.xpose.msra.mxu0 0
      %976 = vmatpush.bf16.xpose.msra.mxu0 %v967
      %977 = vmatmul.bf16.gmra.mxu0 %v964
      %v978 = vpop.f32.mrf.mxu0
      %v979 = vadd.f32 %v954, %v978
      %v980 = vpop.f32.mrf.mxu0
      %v981 = vadd.f32 %v955, %v980
      %982 = vdwg.mxu0
      %v983 = vunpack.c.l.b16 %v915
      %v984 = vunpack.c.l.b16 %v917
      %v985 = vpack.c.b16 %v984, %v983
      %v986 = vunpack.c.l.b16 %v929
      %v987 = vunpack.c.l.b16 %v931
      %v988 = vpack.c.b16 %v987, %v986
      %v990 = vsel %vm962, %v985, 0
      %v993 = vsel %vm962, %v988, 0
      %995 = vmatpush.bf16.xpose.msra.mxu0 0
      %996 = vmatpush.bf16.xpose.msra.mxu0 0
      %997 = vmatpush.bf16.xpose.msra.mxu0 0
      %998 = vmatpush.bf16.xpose.msra.mxu0 0
      %999 = vmatpush.bf16.xpose.msra.mxu0 0
      %1000 = vmatpush.bf16.xpose.msra.mxu0 0
      %1001 = vmatpush.bf16.xpose.msra.mxu0 0
      %1002 = vmatpush.bf16.xpose.msra.mxu0 %v993
      %1003 = vmatmul.bf16.gmra.mxu0 %v990
      %v1004 = vpop.f32.mrf.mxu0
      %v1005 = vadd.f32 %v954, %v1004
      %v1006 = vpop.f32.mrf.mxu0
      %v1007 = vadd.f32 %v955, %v1006
      %1008 = vdwg.mxu0
      %v1009 = vunpack.c.l.b16 %v919
      %v1010 = vunpack.c.l.b16 %v921
      %v1011 = vpack.c.b16 %v1010, %v1009
      %v1012 = vunpack.c.l.b16 %v933
      %v1013 = vunpack.c.l.b16 %v935
      %v1014 = vpack.c.b16 %v1013, %v1012
      %v1016 = vsel %vm962, %v1011, 0
      %v1019 = vsel %vm962, %v1014, 0
      %1021 = vmatpush.bf16.xpose.msra.mxu0 0
      %1022 = vmatpush.bf16.xpose.msra.mxu0 0
      %1023 = vmatpush.bf16.xpose.msra.mxu0 0
      %1024 = vmatpush.bf16.xpose.msra.mxu0 0
      %1025 = vmatpush.bf16.xpose.msra.mxu0 0
      %1026 = vmatpush.bf16.xpose.msra.mxu0 0
      %1027 = vmatpush.bf16.xpose.msra.mxu0 0
      %1028 = vmatpush.bf16.xpose.msra.mxu0 %v1019
      %1029 = vmatmul.bf16.gmra.mxu0 %v1016
      %v1030 = vpop.f32.mrf.mxu0
      %v1031 = vadd.f32 %v954, %v1030
      %v1032 = vpop.f32.mrf.mxu0
      %v1033 = vadd.f32 %v955, %v1032
      %1034 = vdwg.mxu0
      %v1035 = vunpack.c.l.b16 %v923
      %v1036 = vunpack.c.l.b16 %v925
      %v1037 = vpack.c.b16 %v1036, %v1035
      %v1038 = vunpack.c.l.b16 %v937
      %v1039 = vunpack.c.l.b16 %v939
      %v1040 = vpack.c.b16 %v1039, %v1038
      %v1042 = vsel %vm962, %v1037, 0
      %v1045 = vsel %vm962, %v1040, 0
      %1047 = vmatpush.bf16.xpose.msra.mxu0 0
      %1048 = vmatpush.bf16.xpose.msra.mxu0 0
      %1049 = vmatpush.bf16.xpose.msra.mxu0 0
      %1050 = vmatpush.bf16.xpose.msra.mxu0 0
      %1051 = vmatpush.bf16.xpose.msra.mxu0 0
      %1052 = vmatpush.bf16.xpose.msra.mxu0 0
      %1053 = vmatpush.bf16.xpose.msra.mxu0 0
      %1054 = vmatpush.bf16.xpose.msra.mxu0 %v1045
      %1055 = vmatmul.bf16.gmra.mxu0 %v1042
      %v1056 = vpop.f32.mrf.mxu0
      %v1057 = vadd.f32 %v954, %v1056
      %v1058 = vpop.f32.mrf.mxu0
      %v1059 = vadd.f32 %v955, %v1058
      %1060 = vdwg.mxu0
      %vm1061 = vcmask 130048
      %v1062 = vsel %vm1061, %v979, -inf
      %1063 = vmax.xlane.f32.xlu0 %v1062
      %v1064 = vpop.xlane.xlu0 %1063
      %v1065 = vsel %vm1061, %v981, -inf
      %1066 = vmax.xlane.f32.xlu0 %v1065
      %v1067 = vpop.xlane.xlu0 %1066
      %v1068 = vsel %vm1061, %v1005, -inf
      %1069 = vmax.xlane.f32.xlu0 %v1068
      %v1070 = vpop.xlane.xlu0 %1069
      %v1071 = vsel %vm1061, %v1007, -inf
      %1072 = vmax.xlane.f32.xlu0 %v1071
      %v1073 = vpop.xlane.xlu0 %1072
      %v1074 = vsel %vm1061, %v1031, -inf
      %1075 = vmax.xlane.f32.xlu0 %v1074
      %v1076 = vpop.xlane.xlu0 %1075
      %v1077 = vsel %vm1061, %v1033, -inf
      %1078 = vmax.xlane.f32.xlu0 %v1077
      %v1079 = vpop.xlane.xlu0 %1078
      %v1080 = vsel %vm1061, %v1057, -inf
      %1081 = vmax.xlane.f32.xlu0 %v1080
      %v1082 = vpop.xlane.xlu0 %1081
      %v1083 = vsel %vm1061, %v1059, -inf
      %1084 = vmax.xlane.f32.xlu0 %v1083
      %v1085 = vpop.xlane.xlu0 %1084
      %v1086 = vsub.f32 %v979, %v1064
      %v1087 = vsub.f32 %v981, %v1067
      %v1088 = vsub.f32 %v1005, %v1070
      %v1089 = vsub.f32 %v1007, %v1073
      %v1090 = vsub.f32 %v1031, %v1076
      %v1091 = vsub.f32 %v1033, %v1079
      %v1092 = vsub.f32 %v1057, %v1082
      %v1093 = vsub.f32 %v1059, %v1085
      %v1094 = vmul.f32 %v1086, 1.442695
      %v1095 = vpow.pop %v1094
      %v1096 = vmul.f32 %v1087, 1.442695
      %v1097 = vpow.pop %v1096
      %v1098 = vmul.f32 %v1088, 1.442695
      %v1099 = vpow.pop %v1098
      %v1100 = vmul.f32 %v1089, 1.442695
      %v1101 = vpow.pop %v1100
      %v1102 = vmul.f32 %v1090, 1.442695
      %v1103 = vpow.pop %v1102
      %v1104 = vmul.f32 %v1091, 1.442695
      %v1105 = vpow.pop %v1104
      %v1106 = vmul.f32 %v1092, 1.442695
      %v1107 = vpow.pop %v1106
      %v1108 = vmul.f32 %v1093, 1.442695
      %v1109 = vpow.pop %v1108
      %v1110 = vsel %vm1061, %v1095, 0.0
      %1111 = vadd.xlane.f32.xlu0 %v1110
      %v1112 = vpop.xlane.xlu0 %1111
      %v1113 = vsel %vm1061, %v1097, 0.0
      %1114 = vadd.xlane.f32.xlu0 %v1113
      %v1115 = vpop.xlane.xlu0 %1114
      %v1116 = vsel %vm1061, %v1099, 0.0
      %1117 = vadd.xlane.f32.xlu0 %v1116
      %v1118 = vpop.xlane.xlu0 %1117
      %v1119 = vsel %vm1061, %v1101, 0.0
      %1120 = vadd.xlane.f32.xlu0 %v1119
      %v1121 = vpop.xlane.xlu0 %1120
      %v1122 = vsel %vm1061, %v1103, 0.0
      %1123 = vadd.xlane.f32.xlu0 %v1122
      %v1124 = vpop.xlane.xlu0 %1123
      %v1125 = vsel %vm1061, %v1105, 0.0
      %1126 = vadd.xlane.f32.xlu0 %v1125
      %v1127 = vpop.xlane.xlu0 %1126
      %v1128 = vsel %vm1061, %v1107, 0.0
      %1129 = vadd.xlane.f32.xlu0 %v1128
      %v1130 = vpop.xlane.xlu0 %1129
      %v1131 = vsel %vm1061, %v1109, 0.0
      %1132 = vadd.xlane.f32.xlu0 %v1131
      %v1133 = vpop.xlane.xlu0 %1132
      %v1134 = vrcp.pop %v1112
      %v1135 = vrcp.pop %v1115
      %v1136 = vrcp.pop %v1118
      %v1137 = vrcp.pop %v1121
      %v1138 = vrcp.pop %v1124
      %v1139 = vrcp.pop %v1127
      %v1140 = vrcp.pop %v1130
      %v1141 = vrcp.pop %v1133
      %v1142 = vmul.f32 %v1095, %v1134
      %v1143 = vmul.f32 %v1097, %v1135
      %v1144 = vmul.f32 %v1099, %v1136
      %v1145 = vmul.f32 %v1101, %v1137
      %v1146 = vmul.f32 %v1103, %v1138
      %v1147 = vmul.f32 %v1105, %v1139
      %v1148 = vmul.f32 %v1107, %v1140
      %v1149 = vmul.f32 %v1109, %v1141
      %v1150 = vpack.c.bf16 %v1142, %v1142
      %v1151 = vpack.c.bf16 %v1143, %v1143
      %v1152 = vpack.c.bf16 %v1144, %v1144
      %v1153 = vpack.c.bf16 %v1145, %v1145
      %v1154 = vpack.c.bf16 %v1146, %v1146
      %v1155 = vpack.c.bf16 %v1147, %v1147
      %v1156 = vpack.c.bf16 %v1148, %v1148
      %v1157 = vpack.c.bf16 %v1149, %v1149
      %v1160 = vunpack.c.l.b16 %v1150
      %v1161 = vunpack.c.l.b16 %v1151
      %v1162 = vpack.c.b16 %v1161, %v1160
      %v1163 = vunpack.c.l.b16 %v910
      %v1164 = vunpack.c.l.b16 %v911
      %v1165 = vpack.c.b16 %v1164, %v1163
      %v1168 = vsel %vm1061, %v1162, 0
      %1170 = vmatpush.bf16.msra.mxu0 0
      %1171 = vmatpush.bf16.msra.mxu0 0
      %1172 = vmatpush.bf16.msra.mxu0 0
      %1173 = vmatpush.bf16.msra.mxu0 0
      %1174 = vmatpush.bf16.msra.mxu0 0
      %1175 = vmatpush.bf16.msra.mxu0 0
      %1176 = vmatpush.bf16.msra.mxu0 0
      %1177 = vmatpush.bf16.msra.mxu0 %v1165
      %1178 = vmatmul.bf16.gmra.mxu0 %v1168
      %v1179 = vpop.f32.mrf.mxu0
      %v1180 = vadd.f32 0.0, %v1179
      %v1181 = vpop.f32.mrf.mxu0
      %v1182 = vadd.f32 0.0, %v1181
      %1183 = vdwg.mxu0
      %v1186 = vunpack.c.l.b16 %v1152
      %v1187 = vunpack.c.l.b16 %v1153
      %v1188 = vpack.c.b16 %v1187, %v1186
      %v1189 = vunpack.c.l.b16 %v943
      %v1190 = vunpack.c.l.b16 %v945
      %v1191 = vpack.c.b16 %v1190, %v1189
      %v1194 = vsel %vm1061, %v1188, 0
      %1196 = vmatpush.bf16.msra.mxu0 0
      %1197 = vmatpush.bf16.msra.mxu0 0
      %1198 = vmatpush.bf16.msra.mxu0 0
      %1199 = vmatpush.bf16.msra.mxu0 0
      %1200 = vmatpush.bf16.msra.mxu0 0
      %1201 = vmatpush.bf16.msra.mxu0 0
      %1202 = vmatpush.bf16.msra.mxu0 0
      %1203 = vmatpush.bf16.msra.mxu0 %v1191
      %1204 = vmatmul.bf16.gmra.mxu0 %v1194
      %v1205 = vpop.f32.mrf.mxu0
      %v1206 = vadd.f32 0.0, %v1205
      %v1207 = vpop.f32.mrf.mxu0
      %v1208 = vadd.f32 0.0, %v1207
      %1209 = vdwg.mxu0
      %v1212 = vunpack.c.l.b16 %v1154
      %v1213 = vunpack.c.l.b16 %v1155
      %v1214 = vpack.c.b16 %v1213, %v1212
      %v1215 = vunpack.c.l.b16 %v947
      %v1216 = vunpack.c.l.b16 %v949
      %v1217 = vpack.c.b16 %v1216, %v1215
      %v1220 = vsel %vm1061, %v1214, 0
      %1222 = vmatpush.bf16.msra.mxu0 0
      %1223 = vmatpush.bf16.msra.mxu0 0
      %1224 = vmatpush.bf16.msra.mxu0 0
      %1225 = vmatpush.bf16.msra.mxu0 0
      %1226 = vmatpush.bf16.msra.mxu0 0
      %1227 = vmatpush.bf16.msra.mxu0 0
      %1228 = vmatpush.bf16.msra.mxu0 0
      %1229 = vmatpush.bf16.msra.mxu0 %v1217
      %1230 = vmatmul.bf16.gmra.mxu0 %v1220
      %v1231 = vpop.f32.mrf.mxu0
      %v1232 = vadd.f32 0.0, %v1231
      %v1233 = vpop.f32.mrf.mxu0
      %v1234 = vadd.f32 0.0, %v1233
      %1235 = vdwg.mxu0
      %v1238 = vunpack.c.l.b16 %v1156
      %v1239 = vunpack.c.l.b16 %v1157
      %v1240 = vpack.c.b16 %v1239, %v1238
      %v1241 = vunpack.c.l.b16 %v951
      %v1242 = vunpack.c.l.b16 %v953
      %v1243 = vpack.c.b16 %v1242, %v1241
      %v1246 = vsel %vm1061, %v1240, 0
      %1248 = vmatpush.bf16.msra.mxu0 0
      %1249 = vmatpush.bf16.msra.mxu0 0
      %1250 = vmatpush.bf16.msra.mxu0 0
      %1251 = vmatpush.bf16.msra.mxu0 0
      %1252 = vmatpush.bf16.msra.mxu0 0
      %1253 = vmatpush.bf16.msra.mxu0 0
      %1254 = vmatpush.bf16.msra.mxu0 0
      %1255 = vmatpush.bf16.msra.mxu0 %v1243
      %1256 = vmatmul.bf16.gmra.mxu0 %v1246
      %v1257 = vpop.f32.mrf.mxu0
      %v1258 = vadd.f32 0.0, %v1257
      %v1259 = vpop.f32.mrf.mxu0
      %v1260 = vadd.f32 0.0, %v1259
      %1261 = vdwg.mxu0
      %v1262 = vpack.c.bf16 %v1180, %v1180
      %v1263 = vpack.c.bf16 %v1182, %v1182
      %v1264 = vpack.c.bf16 %v1206, %v1206
      %v1265 = vpack.c.bf16 %v1208, %v1208
      %v1266 = vpack.c.bf16 %v1232, %v1232
      %v1267 = vpack.c.bf16 %v1234, %v1234
      %v1268 = vpack.c.bf16 %v1258, %v1258
      %v1269 = vpack.c.bf16 %v1260, %v1260
      %v1270 = vld [vmem:[%s602] sm:$0xf]
      %v1271 = vld [vmem:[%s602 + $0x4] sm:$0xf]
      %v1272 = vld [vmem:[%s602 + $0x8] sm:$0xf]
      %v1273 = vld [vmem:[%s602 + $0xc] sm:$0xf]
      %v1274 = vld [vmem:[%s602 + $0x10] sm:$0xf]
      %v1275 = vld [vmem:[%s602 + $0x14] sm:$0xf]
      %v1276 = vld [vmem:[%s602 + $0x18] sm:$0xf]
      %v1277 = vld [vmem:[%s602 + $0x1c] sm:$0xf]
      %v1278 = vld [vmem:[%s602 + $0x20] sm:$0xf]
      %v1279 = vld [vmem:[%s602 + $0x24] sm:$0xf]
      %v1280 = vld [vmem:[%s602 + $0x28] sm:$0xf]
      %v1281 = vld [vmem:[%s602 + $0x2c] sm:$0xf]
      %v1282 = vld [vmem:[%s602 + $0x30] sm:$0xf]
      %v1283 = vld [vmem:[%s602 + $0x34] sm:$0xf]
      %v1284 = vld [vmem:[%s602 + $0x38] sm:$0xf]
      %v1285 = vld [vmem:[%s602 + $0x3c] sm:$0xf]
      %v1288 = vunpack.c.l.b16 %v1262
      %v1289 = vunpack.c.l.b16 %v1263
      %v1290 = vpack.c.b16 %v1289, %v1288
      %v1295 = vunpack.c.l.b16 %v1270
      %v1296 = vunpack.c.l.b16 %v1271
      %v1297 = vunpack.c.l.b16 %v1272
      %v1298 = vunpack.c.l.b16 %v1273
      %v1299 = vpack.c.b16 %v1296, %v1295
      %v1300 = vpack.c.b16 %v1298, %v1297
      %v1304 = vsel %vm962, %v1290, 0
      %1306 = vmatpush.bf16.msra.mxu0 0
      %1307 = vmatpush.bf16.msra.mxu0 0
      %1308 = vmatpush.bf16.msra.mxu0 0
      %1309 = vmatpush.bf16.msra.mxu0 0
      %1310 = vmatpush.bf16.msra.mxu0 0
      %1311 = vmatpush.bf16.msra.mxu0 0
      %1312 = vmatpush.bf16.msra.mxu0 %v1300
      %1313 = vmatpush.bf16.msra.mxu0 %v1299
      %1314 = vmatmul.bf16.gmra.mxu0 %v1304
      %v1315 = vpop.f32.mrf.mxu0
      %v1316 = vadd.f32 0.0, %v1315
      %v1317 = vpop.f32.mrf.mxu0
      %v1318 = vadd.f32 0.0, %v1317
      %1319 = vdwg.mxu0
      %v1322 = vunpack.c.l.b16 %v1264
      %v1323 = vunpack.c.l.b16 %v1265
      %v1324 = vpack.c.b16 %v1323, %v1322
      %v1329 = vunpack.c.l.b16 %v1274
      %v1330 = vunpack.c.l.b16 %v1275
      %v1331 = vunpack.c.l.b16 %v1276
      %v1332 = vunpack.c.l.b16 %v1277
      %v1333 = vpack.c.b16 %v1330, %v1329
      %v1334 = vpack.c.b16 %v1332, %v1331
      %v1338 = vsel %vm962, %v1324, 0
      %1340 = vmatpush.bf16.msra.mxu0 0
      %1341 = vmatpush.bf16.msra.mxu0 0
      %1342 = vmatpush.bf16.msra.mxu0 0
      %1343 = vmatpush.bf16.msra.mxu0 0
      %1344 = vmatpush.bf16.msra.mxu0 0
      %1345 = vmatpush.bf16.msra.mxu0 0
      %1346 = vmatpush.bf16.msra.mxu0 %v1334
      %1347 = vmatpush.bf16.msra.mxu0 %v1333
      %1348 = vmatmul.bf16.gmra.mxu0 %v1338
      %v1349 = vpop.f32.mrf.mxu0
      %v1350 = vadd.f32 0.0, %v1349
      %v1351 = vpop.f32.mrf.mxu0
      %v1352 = vadd.f32 0.0, %v1351
      %1353 = vdwg.mxu0
      %v1356 = vunpack.c.l.b16 %v1266
      %v1357 = vunpack.c.l.b16 %v1267
      %v1358 = vpack.c.b16 %v1357, %v1356
      %v1363 = vunpack.c.l.b16 %v1278
      %v1364 = vunpack.c.l.b16 %v1279
      %v1365 = vunpack.c.l.b16 %v1280
      %v1366 = vunpack.c.l.b16 %v1281
      %v1367 = vpack.c.b16 %v1364, %v1363
      %v1368 = vpack.c.b16 %v1366, %v1365
      %v1372 = vsel %vm962, %v1358, 0
      %1374 = vmatpush.bf16.msra.mxu0 0
      %1375 = vmatpush.bf16.msra.mxu0 0
      %1376 = vmatpush.bf16.msra.mxu0 0
      %1377 = vmatpush.bf16.msra.mxu0 0
      %1378 = vmatpush.bf16.msra.mxu0 0
      %1379 = vmatpush.bf16.msra.mxu0 0
      %1380 = vmatpush.bf16.msra.mxu0 %v1368
      %1381 = vmatpush.bf16.msra.mxu0 %v1367
      %1382 = vmatmul.bf16.gmra.mxu0 %v1372
      %v1383 = vpop.f32.mrf.mxu0
      %v1384 = vadd.f32 0.0, %v1383
      %v1385 = vpop.f32.mrf.mxu0
      %v1386 = vadd.f32 0.0, %v1385
      %1387 = vdwg.mxu0
      %v1390 = vunpack.c.l.b16 %v1268
      %v1391 = vunpack.c.l.b16 %v1269
      %v1392 = vpack.c.b16 %v1391, %v1390
      %v1397 = vunpack.c.l.b16 %v1282
      %v1398 = vunpack.c.l.b16 %v1283
      %v1399 = vunpack.c.l.b16 %v1284
      %v1400 = vunpack.c.l.b16 %v1285
      %v1401 = vpack.c.b16 %v1398, %v1397
      %v1402 = vpack.c.b16 %v1400, %v1399
      %v1406 = vsel %vm962, %v1392, 0
      %1408 = vmatpush.bf16.msra.mxu0 0
      %1409 = vmatpush.bf16.msra.mxu0 0
      %1410 = vmatpush.bf16.msra.mxu0 0
      %1411 = vmatpush.bf16.msra.mxu0 0
      %1412 = vmatpush.bf16.msra.mxu0 0
      %1413 = vmatpush.bf16.msra.mxu0 0
      %1414 = vmatpush.bf16.msra.mxu0 %v1402
      %1415 = vmatpush.bf16.msra.mxu0 %v1401
      %1416 = vmatmul.bf16.gmra.mxu0 %v1406
      %v1417 = vpop.f32.mrf.mxu0
      %v1418 = vadd.f32 0.0, %v1417
      %v1419 = vpop.f32.mrf.mxu0
      %v1420 = vadd.f32 0.0, %v1419
      %1421 = vdwg.mxu0
      %v1422 = vadd.f32 %v1316, %v1350
      %v1423 = vadd.f32 %v1422, %v1384
      %v1424 = vadd.f32 %v1423, %v1418
      %v1425 = vadd.f32 %v1318, %v1352
      %v1426 = vadd.f32 %v1425, %v1386
      %v1427 = vadd.f32 %v1426, %v1420
      %v1428 = vadd.f32 %v637, %v1424
      %v1429 = vadd.f32 %v638, %v1427
      %v1430 = vld [vmem:[%s605] sm:$0x1]
      %v1432 = vperm.slane %v1430, 0
      %v1434 = vadd.f32 %v1428, %v1432
      %v1435 = vadd.f32 %v1429, %v1432
      %v1436 = vld [vmem:[%s608] sm:$0x1]
      %v1437 = vld [vmem:[%s611] sm:$0x1]
      %1438 = vadd.xlane.f32.xlu0 %v1434
      %v1439 = vpop.xlane.xlu0 %1438
      %1440 = vadd.xlane.f32.xlu0 %v1435
      %v1441 = vpop.xlane.xlu0 %1440
      %v1442 = vmul.f32 %v1439, 0.03125
      %v1443 = vmul.f32 %v1441, 0.03125
      %v1444 = vmul.f32 %v1434, %v1434
      %v1445 = vmul.f32 %v1435, %v1435
      %1446 = vadd.xlane.f32.xlu0 %v1444
      %v1447 = vpop.xlane.xlu0 %1446
      %1448 = vadd.xlane.f32.xlu0 %v1445
      %v1449 = vpop.xlane.xlu0 %1448
      %v1450 = vmul.f32 %v1447, 0.03125
      %v1451 = vmul.f32 %v1449, 0.03125
      %v1452 = vmul.f32 %v1442, %v1442
      %v1453 = vmul.f32 %v1443, %v1443
      %v1454 = vsub.f32 %v1450, %v1452
      %v1455 = vsub.f32 %v1451, %v1453
      %v1456 = vsub.f32 %v1434, %v1442
      %v1457 = vsub.f32 %v1435, %v1443
      %v1458 = vadd.f32 %v1454, 1e-05
      %v1459 = vadd.f32 %v1455, 1e-05
      %v1460 = vrsqrt.pop %v1458
      %v1461 = vmul.f32 %v1460, %v1458
      %v1462 = vmul.f32 %v1461, %v1460
      %v1463 = vmul.f32 0.5, %v1462
      %v1464 = vsub.f32 1.5, %v1463
      %v1465 = vmul.f32 %v1460, %v1464
      %vm1466 = vweird.f32 %v1458
      %vm1467 = vweird.f32 %v1460
      %vm1468 = vmor %vm1466, %vm1467
      %v1469 = vsel %vm1468, %v1460, %v1465
      %v1470 = vrsqrt.pop %v1459
      %v1471 = vmul.f32 %v1470, %v1459
      %v1472 = vmul.f32 %v1471, %v1470
      %v1473 = vmul.f32 0.5, %v1472
      %v1474 = vsub.f32 1.5, %v1473
      %v1475 = vmul.f32 %v1470, %v1474
      %vm1476 = vweird.f32 %v1459
      %vm1477 = vweird.f32 %v1470
      %vm1478 = vmor %vm1476, %vm1477
      %v1479 = vsel %vm1478, %v1470, %v1475
      %v1480 = vmul.f32 %v1456, %v1469
      %v1481 = vmul.f32 %v1457, %v1479
      %v1483 = vperm.slane %v1436, 0
      %v1485 = vmul.f32 %v1480, %v1483
      %v1486 = vmul.f32 %v1481, %v1483
      %v1488 = vperm.slane %v1437, 0
      %v1490 = vadd.f32 %v1485, %v1488
      %v1491 = vadd.f32 %v1486, %v1488
      %v1492 = vpack.c.bf16 %v1491, %v1490
      %v1493 = vld [vmem:[%s616] sm:$0xf]
      %v1494 = vld [vmem:[%s616 + $0x4] sm:$0xf]
      %v1495 = vld [vmem:[%s616 + $0x8] sm:$0xf]
      %v1496 = vld [vmem:[%s616 + $0xc] sm:$0xf]
      %v1497 = vld [vmem:[%s616 + $0x10] sm:$0xf]
      %v1498 = vld [vmem:[%s616 + $0x14] sm:$0xf]
      %v1499 = vld [vmem:[%s616 + $0x18] sm:$0xf]
      %v1500 = vld [vmem:[%s616 + $0x1c] sm:$0xf]
      %v1501 = vld [vmem:[%s616 + $0x20] sm:$0xf]
      %v1502 = vld [vmem:[%s616 + $0x24] sm:$0xf]
      %v1503 = vld [vmem:[%s616 + $0x28] sm:$0xf]
      %v1504 = vld [vmem:[%s616 + $0x2c] sm:$0xf]
      %v1505 = vld [vmem:[%s616 + $0x30] sm:$0xf]
      %v1506 = vld [vmem:[%s616 + $0x34] sm:$0xf]
      %v1507 = vld [vmem:[%s616 + $0x38] sm:$0xf]
      %v1508 = vld [vmem:[%s616 + $0x3c] sm:$0xf]
      %v1509 = vld [vmem:[%s619] sm:$0x1]
      %v1511 = vperm.slane %v1509, 0
      %v1529 = vunpack.c.l.b16 %v1493
      %v1530 = vunpack.c.l.b16 %v1494
      %v1531 = vunpack.c.l.b16 %v1495
      %v1532 = vunpack.c.l.b16 %v1496
      %v1533 = vunpack.c.l.b16 %v1497
      %v1534 = vunpack.c.l.b16 %v1498
      %v1535 = vunpack.c.l.b16 %v1499
      %v1536 = vunpack.c.l.b16 %v1500
      %v1537 = vunpack.c.l.b16 %v1501
      %v1538 = vunpack.c.l.b16 %v1502
      %v1539 = vunpack.c.l.b16 %v1503
      %v1540 = vunpack.c.l.b16 %v1504
      %v1541 = vunpack.c.l.b16 %v1505
      %v1542 = vunpack.c.l.b16 %v1506
      %v1543 = vunpack.c.l.b16 %v1507
      %v1544 = vunpack.c.l.b16 %v1508
      %v1545 = vpack.c.b16 %v1530, %v1529
      %v1546 = vpack.c.b16 %v1532, %v1531
      %v1547 = vpack.c.b16 %v1534, %v1533
      %v1548 = vpack.c.b16 %v1536, %v1535
      %v1549 = vpack.c.b16 %v1538, %v1537
      %v1550 = vpack.c.b16 %v1540, %v1539
      %v1551 = vpack.c.b16 %v1542, %v1541
      %v1552 = vpack.c.b16 %v1544, %v1543
      %1561 = vmatpush.bf16.msra.mxu0 %v1552
      %1562 = vmatpush.bf16.msra.mxu0 %v1551
      %1563 = vmatpush.bf16.msra.mxu0 %v1550
      %1564 = vmatpush.bf16.msra.mxu0 %v1549
      %1565 = vmatpush.bf16.msra.mxu0 %v1548
      %1566 = vmatpush.bf16.msra.mxu0 %v1547
      %1567 = vmatpush.bf16.msra.mxu0 %v1546
      %1568 = vmatpush.bf16.msra.mxu0 %v1545
      %1569 = vmatmul.bf16.gmra.mxu0 %v1492
      %v1570 = vpop.f32.mrf.mxu0
      %v1571 = vadd.f32 %v1511, %v1570
      %v1572 = vpop.f32.mrf.mxu0
      %v1573 = vadd.f32 %v1511, %v1572
      %1574 = vdwg.mxu0
      %v1575 = vmul.f32 %v1571, 1.702
      %v1576 = vmul.f32 %v1573, 1.702
      %v1577 = vxor.u32 %v1575, 2147483648
      %v1578 = vxor.u32 %v1576, 2147483648
      %v1579 = vmul.f32 %v1577, 1.442695
      %v1580 = vpow.pop %v1579
      %v1581 = vmul.f32 %v1578, 1.442695
      %v1582 = vpow.pop %v1581
      %v1583 = vadd.f32 %v1580, 1.0
      %v1584 = vadd.f32 %v1582, 1.0
      %v1585 = vrcp.pop %v1583
      %v1586 = vmul.f32 %v1583, %v1585
      %v1587 = vsub.f32 1.0, %v1586
      %v1588 = vmul.f32 %v1585, %v1587
      %v1589 = vadd.f32 %v1585, %v1588
      %vm1590 = vweird.f32 %v1583
      %vm1591 = vweird.f32 %v1585
      %vm1592 = vmor %vm1590, %vm1591
      %v1593 = vsel %vm1592, %v1585, %v1589
      %v1594 = vand.u32 2147483647, %v1583
      %vm1595 = vcmp.eq.f32.partialorder %v1594, 8.507059e+37
      %v1596 = vand.u32 %v1583, 2147483648
      %v1597 = vor.u32 1.1754944e-38, %v1596
      %v1598 = vsel %vm1595, %v1597, %v1593
      %v1599 = vmul.f32 1.0, %v1598
      %v1600 = vrcp.pop %v1584
      %v1601 = vmul.f32 %v1584, %v1600
      %v1602 = vsub.f32 1.0, %v1601
      %v1603 = vmul.f32 %v1600, %v1602
      %v1604 = vadd.f32 %v1600, %v1603
      %vm1605 = vweird.f32 %v1584
      %vm1606 = vweird.f32 %v1600
      %vm1607 = vmor %vm1605, %vm1606
      %v1608 = vsel %vm1607, %v1600, %v1604
      %v1609 = vand.u32 2147483647, %v1584
      %vm1610 = vcmp.eq.f32.partialorder %v1609, 8.507059e+37
      %v1611 = vand.u32 %v1584, 2147483648
      %v1612 = vor.u32 1.1754944e-38, %v1611
      %v1613 = vsel %vm1610, %v1612, %v1608
      %v1614 = vmul.f32 1.0, %v1613
      %v1615 = vmul.f32 %v1571, %v1599
      %v1616 = vmul.f32 %v1573, %v1614
      %v1617 = vpack.c.bf16 %v1616, %v1615
      %v1618 = vld [vmem:[%s624] sm:$0xf]
      %v1619 = vld [vmem:[%s624 + $0x4] sm:$0xf]
      %v1620 = vld [vmem:[%s624 + $0x8] sm:$0xf]
      %v1621 = vld [vmem:[%s624 + $0xc] sm:$0xf]
      %v1622 = vld [vmem:[%s624 + $0x10] sm:$0xf]
      %v1623 = vld [vmem:[%s624 + $0x14] sm:$0xf]
      %v1624 = vld [vmem:[%s624 + $0x18] sm:$0xf]
      %v1625 = vld [vmem:[%s624 + $0x1c] sm:$0xf]
      %v1626 = vld [vmem:[%s624 + $0x20] sm:$0xf]
      %v1627 = vld [vmem:[%s624 + $0x24] sm:$0xf]
      %v1628 = vld [vmem:[%s624 + $0x28] sm:$0xf]
      %v1629 = vld [vmem:[%s624 + $0x2c] sm:$0xf]
      %v1630 = vld [vmem:[%s624 + $0x30] sm:$0xf]
      %v1631 = vld [vmem:[%s624 + $0x34] sm:$0xf]
      %v1632 = vld [vmem:[%s624 + $0x38] sm:$0xf]
      %v1633 = vld [vmem:[%s624 + $0x3c] sm:$0xf]
      %v1634 = vld [vmem:[%s627] sm:$0x1]
      %v1636 = vperm.slane %v1634, 0
      %v1654 = vunpack.c.l.b16 %v1618
      %v1655 = vunpack.c.l.b16 %v1619
      %v1656 = vunpack.c.l.b16 %v1620
      %v1657 = vunpack.c.l.b16 %v1621
      %v1658 = vunpack.c.l.b16 %v1622
      %v1659 = vunpack.c.l.b16 %v1623
      %v1660 = vunpack.c.l.b16 %v1624
      %v1661 = vunpack.c.l.b16 %v1625
      %v1662 = vunpack.c.l.b16 %v1626
      %v1663 = vunpack.c.l.b16 %v1627
      %v1664 = vunpack.c.l.b16 %v1628
      %v1665 = vunpack.c.l.b16 %v1629
      %v1666 = vunpack.c.l.b16 %v1630
      %v1667 = vunpack.c.l.b16 %v1631
      %v1668 = vunpack.c.l.b16 %v1632
      %v1669 = vunpack.c.l.b16 %v1633
      %v1670 = vpack.c.b16 %v1655, %v1654
      %v1671 = vpack.c.b16 %v1657, %v1656
      %v1672 = vpack.c.b16 %v1659, %v1658
      %v1673 = vpack.c.b16 %v1661, %v1660
      %v1674 = vpack.c.b16 %v1663, %v1662
      %v1675 = vpack.c.b16 %v1665, %v1664
      %v1676 = vpack.c.b16 %v1667, %v1666
      %v1677 = vpack.c.b16 %v1669, %v1668
      %1686 = vmatpush.bf16.msra.mxu0 %v1677
      %1687 = vmatpush.bf16.msra.mxu0 %v1676
      %1688 = vmatpush.bf16.msra.mxu0 %v1675
      %1689 = vmatpush.bf16.msra.mxu0 %v1674
      %1690 = vmatpush.bf16.msra.mxu0 %v1673
      %1691 = vmatpush.bf16.msra.mxu0 %v1672
      %1692 = vmatpush.bf16.msra.mxu0 %v1671
      %1693 = vmatpush.bf16.msra.mxu0 %v1670
      %1694 = vmatmul.bf16.gmra.mxu0 %v1617
      %v1695 = vpop.f32.mrf.mxu0
      %v1696 = vadd.f32 %v1636, %v1695
      %v1697 = vpop.f32.mrf.mxu0
      %v1698 = vadd.f32 %v1636, %v1697
      %1699 = vdwg.mxu0
      %v1700 = vadd.f32 %v1434, %v1696
      %v1701 = vadd.f32 %v1435, %v1698
      %1702 = vst [vmem:[%s14] sm:$0xff] %v1700
      %1703 = vst [vmem:[%s14 + $0x8] sm:$0xff] %v1701
      // Predicated region
      $region81: #{transformer_forward.1} parent=75 // pred_check
        %p1704 = pneg %p392
      $region82: #{transformer_forward.1} parent=75 // pred_check_branch
        %1706 = sbr.rel (%p1704) target = $region84
      $region83: #{transformer_forward.1} parent=75 // pred_region
        _
      $region84: #{transformer_forward.1} parent=75 // pred_fallthru
        _
      // Predicated region
      $region85: #{transformer_forward.1} parent=75 // pred_check
        %p1707 = pneg %p392
      $region86: #{transformer_forward.1} parent=75 // pred_check_branch
        %1709 = sbr.rel (%p1707) target = $region88
      $region87: #{transformer_forward.1} parent=75 // pred_region
        _
      $region88: #{transformer_forward.1} parent=75 // pred_fallthru
        _
    $region76: #{transformer_forward.1} parent=5 // pred_fallthru
      _
    %p1710 = scmp.le.s32.totalorder 2, %s20
    // Predicated region
    $region89: #{transformer_forward.1} parent=5 // pred_check
      %p1711 = pneg %p1710
    $region90: #{transformer_forward.1} parent=5 // pred_check_branch
      %1713 = sbr.rel (%p1711) target = $region92
    $region91: #{transformer_forward.1} parent=5 // pred_region
      %s1714 = ssub.s32 %s20, 2
    $region92: #{transformer_forward.1} parent=5 // pred_fallthru
      _
  $region6: #{transformer_forward.1} parent=0 // loop_footer
    %s24 = sadd.s32 1, %s20
  $region7: #{transformer_forward.1} parent=0 // loop_footer_branch
    %19 = sbr.rel target = $region3
  $region8: #{transformer_forward.1} parent=0 // loop_exit
    _

</llo_original>
